<compile_context>
chip_gen: v7x
topology: tpu7x:2x2x1
jax: 0.10.0
libtpu: 0.0.40
codegen_flags: <defaults>
</compile_context>

<pallas_src>
import functools

import jax
import jax.numpy as jnp
from jax.experimental import pallas as pl
from jax.experimental.pallas import tpu as pltpu

CPAD = 8        # input channels zero-padded to one sublane
KPAD = 128      # im2col contraction dim (9 * CPAD = 72, zero-padded to 128)
HIDDEN = 128    # conv output channels (lane-dense)
NC_PAD = 128    # classifier output padded to a full lane width


def _digit_kernel(x_ref, conv_w_ref, conv_b_ref, fc_w_ref, fc_b_ref, out_ref,
                  *, h, w, cpad, kpad, nc):
    # Full padded image for this batch element: (h+2, w+2, cpad) bf16.
    x = x_ref[...]

    # In-VMEM im2col: concatenate the 9 shifted 3x3 windows along the channel
    # axis and zero-pad to K=kpad -> one lane-dense (h*w, kpad) bf16 LHS.
    cols = [x[dy:dy + h, dx:dx + w, :] for dy in range(3) for dx in range(3)]
    pad_k = kpad - 9 * cpad
    if pad_k:
        cols.append(jnp.zeros((h, w, pad_k), jnp.bfloat16))
    slab = jnp.concatenate(cols, axis=-1).reshape(h * w, kpad)

    # Single MXU matmul for the whole 3x3 conv, f32 accumulation.
    feat = jnp.dot(slab, conv_w_ref[...], preferred_element_type=jnp.float32)
    feat = jnp.maximum(feat + conv_b_ref[...], 0.0)          # bias + ReLU

    # Global average pool (row-sum over all h*w positions).
    pooled = jnp.sum(feat, axis=0, keepdims=True) * (1.0 / (h * w))  # (1, C)

    # Classifier head (bf16 MXU path, f32 accumulate) + masked softmax.
    logits = jnp.dot(pooled.astype(jnp.bfloat16), fc_w_ref[...],
                     preferred_element_type=jnp.float32) + fc_b_ref[...]
    col = jax.lax.broadcasted_iota(jnp.int32, logits.shape, 1)
    logits = jnp.where(col < nc, logits, -jnp.inf)            # mask padding
    m = jnp.max(logits, axis=-1, keepdims=True)
    e = jnp.exp(logits - m)
    s = jnp.sum(e, axis=-1, keepdims=True)
    out_ref[...] = (e / s).reshape(out_ref.shape)             # exact divide


def digit_model_forward(x_nchw, params, num_classes):
    """x_nchw: (B, 3, H, W) float32. Returns (B, num_classes) softmax probs."""
    conv_w = params["conv_w"]          # (KPAD, C)      bf16
    conv_b = params["conv_b"]          # (1, C)         f32
    fc_w = params["fc_w"]              # (C, NC_PAD)    bf16
    fc_b = params["fc_b"]              # (1, NC_PAD)    f32

    B, cin, H, W = x_nchw.shape
    nc_pad = fc_w.shape[1]

    # NCHW -> NHWC, bf16, zero-pad channels to CPAD, 1-pixel spatial halo.
    # TODO(synk): this transpose/pad pass could itself be folded into the
    #             kernel via in-kernel DMA from the raw NCHW image.
    x = jnp.transpose(x_nchw, (0, 2, 3, 1)).astype(jnp.bfloat16)
    x = jnp.pad(x, ((0, 0), (1, 1), (1, 1), (0, CPAD - cin)))

    kernel = functools.partial(_digit_kernel, h=H, w=W, cpad=CPAD, kpad=KPAD,
                               nc=num_classes)

    out = pl.pallas_call(
        kernel,
        out_shape=jax.ShapeDtypeStruct((B, 1, nc_pad), jnp.float32),
        grid_spec=pltpu.PrefetchScalarGridSpec(
            num_scalar_prefetch=0,
            grid=(B,),
            in_specs=[
                pl.BlockSpec((pl.Squeezed(), H + 2, W + 2, CPAD),
                             lambda b: (b, 0, 0, 0)),
                pl.BlockSpec(conv_w.shape, lambda b: (0, 0)),
                pl.BlockSpec(conv_b.shape, lambda b: (0, 0)),
                pl.BlockSpec(fc_w.shape, lambda b: (0, 0)),
                pl.BlockSpec(fc_b.shape, lambda b: (0, 0)),
            ],
            out_specs=pl.BlockSpec((1, 1, nc_pad), lambda b: (b, 0, 0)),
        ),
        compiler_params=pltpu.CompilerParams(
            dimension_semantics=("parallel",)),
    )(x, conv_w, conv_b, fc_w, fc_b)

    return out.reshape(B, nc_pad)[:, :num_classes]


def init_params(key, in_chans=3, hidden=HIDDEN, num_classes=10):
    k1, k2, k3, k4 = jax.random.split(key, 4)
    cw = jax.random.normal(k1, (3, 3, in_chans, hidden), jnp.float32) * 0.1
    cw = jnp.pad(cw, ((0, 0), (0, 0), (0, CPAD - in_chans), (0, 0)))
    cw = cw.reshape(9 * CPAD, hidden)
    cw = jnp.pad(cw, ((0, KPAD - 9 * CPAD), (0, 0))).astype(jnp.bfloat16)
    cb = jax.random.normal(k2, (1, hidden), jnp.float32) * 0.01
    fw = jax.random.normal(k3, (hidden, num_classes), jnp.float32) * 0.1
    fw = jnp.pad(fw, ((0, 0), (0, NC_PAD - num_classes))).astype(jnp.bfloat16)
    fb = jax.random.normal(k4, (1, num_classes), jnp.float32) * 0.01
    fb = jnp.pad(fb, ((0, 0), (0, NC_PAD - num_classes)))
    return {"conv_w": cw, "conv_b": cb, "fc_w": fw, "fc_b": fb}


def _reference_forward(x_nchw, params, num_classes):
    """Pure-JAX reference matching the kernel's bf16 matmul operands."""
    cw = params["conv_w"].astype(jnp.float32)[:9 * CPAD]
    cw = cw.reshape(3, 3, CPAD, -1)
    cb = params["conv_b"]
    fw = params["fc_w"].astype(jnp.float32)
    fb = params["fc_b"]
    B, cin, H, W = x_nchw.shape
    x = jnp.transpose(x_nchw, (0, 2, 3, 1)).astype(jnp.bfloat16)
    x = x.astype(jnp.float32)
    x = jnp.pad(x, ((0, 0), (1, 1), (1, 1), (0, CPAD - cin)))
    feat = jnp.zeros((B, H, W, cw.shape[-1]), jnp.float32)
    for dy in range(3):
        for dx in range(3):
            feat = feat + jnp.einsum('bhwc,cd->bhwd',
                                     x[:, dy:dy + H, dx:dx + W, :], cw[dy, dx])
    feat = jnp.maximum(feat + cb[0], 0.0)
    pooled = feat.mean(axis=(1, 2))
    pooled = pooled.astype(jnp.bfloat16).astype(jnp.float32)
    logits = (pooled @ fw + fb[0])[:, :num_classes]
    return jax.nn.softmax(logits, axis=-1)


if __name__ == "__main__":
    key = jax.random.PRNGKey(0)
    kx, kp = jax.random.split(key)

    B, Cin, H, W = 2, 3, 16, 16
    num_classes = 10
    x = jax.random.normal(kx, (B, Cin, H, W), jnp.float32)
    params = init_params(kp, in_chans=Cin, hidden=HIDDEN,
                         num_classes=num_classes)

    probs = digit_model_forward(x, params, num_classes)
    probs = jax.block_until_ready(probs)

    assert probs.shape == (B, num_classes)
    # exact-divide softmax: rows sum to 1 up to f32 rounding
    assert bool(jnp.all(jnp.abs(jnp.sum(probs, axis=-1) - 1.0) < 1e-3))
    # match pure-JAX reference
    ref = _reference_forward(x, params, num_classes)
    assert bool(jnp.all(jnp.abs(probs - ref) < 1e-2))
    print("KERNEL_OK")
</pallas_src>

<mosaic_0001>
module attributes {stable_mosaic.version = 11 : i64} {
  func.func @_digit_kernel(%arg0: i32, %arg1: memref<1x18x18x8xbf16, #tpu.memory_space<vmem>>, %arg2: memref<128x128xbf16, #tpu.memory_space<vmem>>, %arg3: memref<1x128xf32, #tpu.memory_space<vmem>>, %arg4: memref<128x128xbf16, #tpu.memory_space<vmem>>, %arg5: memref<1x128xf32, #tpu.memory_space<vmem>>, %arg6: memref<1x1x128xf32, #tpu.memory_space<vmem>>) attributes {dimension_semantics = [#tpu.dimension_semantics<parallel>], iteration_bounds = array<i64: 2>, scalar_prefetch = 0 : i64, scratch_operands = 0 : i64, tpu.core_type = #tpu.core_type<tc>, window_params = [{transform_indices = @transform_0, window_bounds = array<i64: 1, 18, 18, 8>}, {pipeline_mode = #tpu.pipeline_mode<synchronous>, transform_indices = @transform_1, window_bounds = array<i64: 128, 128>}, {pipeline_mode = #tpu.pipeline_mode<synchronous>, transform_indices = @transform_2, window_bounds = array<i64: 1, 128>}, {pipeline_mode = #tpu.pipeline_mode<synchronous>, transform_indices = @transform_3, window_bounds = array<i64: 128, 128>}, {pipeline_mode = #tpu.pipeline_mode<synchronous>, transform_indices = @transform_4, window_bounds = array<i64: 1, 128>}, {transform_indices = @transform_5, window_bounds = array<i64: 1, 1, 128>}]} {
    %c0 = arith.constant 0 : index
    %c0_0 = arith.constant 0 : index
    %c0_1 = arith.constant 0 : index
    %c0_2 = arith.constant 0 : index
    %0 = vector.load %arg1[%c0, %c0_0, %c0_1, %c0_2] : memref<1x18x18x8xbf16, #tpu.memory_space<vmem>>, vector<1x18x18x8xbf16>
    %1 = vector.shape_cast %0 : vector<1x18x18x8xbf16> to vector<18x18x8xbf16>
    %2 = vector.extract_strided_slice %1 {offsets = [0, 0, 0], sizes = [16, 16, 8], strides = [1, 1, 1]} : vector<18x18x8xbf16> to vector<16x16x8xbf16>
    %3 = vector.extract_strided_slice %1 {offsets = [0, 1, 0], sizes = [16, 16, 8], strides = [1, 1, 1]} : vector<18x18x8xbf16> to vector<16x16x8xbf16>
    %4 = vector.extract_strided_slice %1 {offsets = [0, 2, 0], sizes = [16, 16, 8], strides = [1, 1, 1]} : vector<18x18x8xbf16> to vector<16x16x8xbf16>
    %5 = vector.extract_strided_slice %1 {offsets = [1, 0, 0], sizes = [16, 16, 8], strides = [1, 1, 1]} : vector<18x18x8xbf16> to vector<16x16x8xbf16>
    %6 = vector.extract_strided_slice %1 {offsets = [1, 1, 0], sizes = [16, 16, 8], strides = [1, 1, 1]} : vector<18x18x8xbf16> to vector<16x16x8xbf16>
    %7 = vector.extract_strided_slice %1 {offsets = [1, 2, 0], sizes = [16, 16, 8], strides = [1, 1, 1]} : vector<18x18x8xbf16> to vector<16x16x8xbf16>
    %8 = vector.extract_strided_slice %1 {offsets = [2, 0, 0], sizes = [16, 16, 8], strides = [1, 1, 1]} : vector<18x18x8xbf16> to vector<16x16x8xbf16>
    %9 = vector.extract_strided_slice %1 {offsets = [2, 1, 0], sizes = [16, 16, 8], strides = [1, 1, 1]} : vector<18x18x8xbf16> to vector<16x16x8xbf16>
    %10 = vector.extract_strided_slice %1 {offsets = [2, 2, 0], sizes = [16, 16, 8], strides = [1, 1, 1]} : vector<18x18x8xbf16> to vector<16x16x8xbf16>
    %cst = arith.constant 0.000000e+00 : bf16
    %11 = vector.broadcast %cst : bf16 to vector<16x16x56xbf16>
    %12 = tpu.concatenate %2, %3, %4, %5, %6, %7, %8, %9, %10, %11 in 2 : vector<16x16x8xbf16>, vector<16x16x8xbf16>, vector<16x16x8xbf16>, vector<16x16x8xbf16>, vector<16x16x8xbf16>, vector<16x16x8xbf16>, vector<16x16x8xbf16>, vector<16x16x8xbf16>, vector<16x16x8xbf16>, vector<16x16x56xbf16> -> vector<16x16x128xbf16>
    %13 = vector.shape_cast %12 : vector<16x16x128xbf16> to vector<256x128xbf16>
    %c0_3 = arith.constant 0 : index
    %c0_4 = arith.constant 0 : index
    %14 = vector.load %arg2[%c0_3, %c0_4] : memref<128x128xbf16, #tpu.memory_space<vmem>>, vector<128x128xbf16>
    %cst_5 = arith.constant dense<0.000000e+00> : vector<256x128xf32>
    %15 = tpu.matmul %13, %14, %cst_5 {dimension_numbers = #tpu.dot_dimension_numbers<[1], [0], [0], [1], [0, 0, 1, 1], [], []>} : vector<256x128xbf16>, vector<128x128xbf16>, vector<256x128xf32> -> vector<256x128xf32>
    %c0_6 = arith.constant 0 : index
    %c0_7 = arith.constant 0 : index
    %16 = vector.load %arg3[%c0_6, %c0_7] : memref<1x128xf32, #tpu.memory_space<vmem>>, vector<1x128xf32>
    %17 = vector.broadcast %16 : vector<1x128xf32> to vector<256x128xf32>
    %18 = arith.addf %15, %17 : vector<256x128xf32>
    %cst_8 = arith.constant 0.000000e+00 : f32
    %19 = vector.broadcast %cst_8 : f32 to vector<256x128xf32>
    %20 = arith.maximumf %18, %19 : vector<256x128xf32>
    %cst_9 = arith.constant dense<0.000000e+00> : vector<128xf32>
    %21 = vector.multi_reduction <add>, %20, %cst_9 [0] : vector<256x128xf32> to vector<128xf32>
    %22 = vector.shape_cast %21 : vector<128xf32> to vector<1x128xf32>
    %cst_10 = arith.constant 3.906250e-03 : f32
    %23 = vector.broadcast %cst_10 : f32 to vector<1x128xf32>
    %24 = arith.mulf %22, %23 : vector<1x128xf32>
    %25 = arith.truncf %24 : vector<1x128xf32> to vector<1x128xbf16>
    %c0_11 = arith.constant 0 : index
    %c0_12 = arith.constant 0 : index
    %26 = vector.load %arg4[%c0_11, %c0_12] : memref<128x128xbf16, #tpu.memory_space<vmem>>, vector<128x128xbf16>
    %cst_13 = arith.constant dense<0.000000e+00> : vector<1x128xf32>
    %27 = tpu.matmul %25, %26, %cst_13 {dimension_numbers = #tpu.dot_dimension_numbers<[1], [0], [0], [1], [0, 0, 1, 1], [], []>} : vector<1x128xbf16>, vector<128x128xbf16>, vector<1x128xf32> -> vector<1x128xf32>
    %c0_14 = arith.constant 0 : index
    %c0_15 = arith.constant 0 : index
    %28 = vector.load %arg5[%c0_14, %c0_15] : memref<1x128xf32, #tpu.memory_space<vmem>>, vector<1x128xf32>
    %29 = arith.addf %27, %28 : vector<1x128xf32>
    %30 = tpu.iota {dimensions = array<i32: 1>} : vector<1x128xi32>
    %c10_i32 = arith.constant 10 : i32
    %31 = vector.broadcast %c10_i32 : i32 to vector<1x128xi32>
    %32 = arith.cmpi slt, %30, %31 : vector<1x128xi32>
    %cst_16 = arith.constant 0xFF800000 : f32
    %33 = vector.broadcast %cst_16 : f32 to vector<1x128xf32>
    %34 = arith.select %32, %29, %33 : vector<1x128xi1>, vector<1x128xf32>
    %cst_17 = arith.constant dense<0xFF800000> : vector<1xf32>
    %35 = vector.multi_reduction <maximumf>, %34, %cst_17 [1] : vector<1x128xf32> to vector<1xf32>
    %36 = vector.shape_cast %35 : vector<1xf32> to vector<1x1xf32>
    %37 = vector.broadcast %36 : vector<1x1xf32> to vector<1x128xf32>
    %38 = arith.subf %34, %37 : vector<1x128xf32>
    %39 = math.exp %38 : vector<1x128xf32>
    %cst_18 = arith.constant dense<0.000000e+00> : vector<1xf32>
    %40 = vector.multi_reduction <add>, %39, %cst_18 [1] : vector<1x128xf32> to vector<1xf32>
    %41 = vector.shape_cast %40 : vector<1xf32> to vector<1x1xf32>
    %42 = vector.broadcast %41 : vector<1x1xf32> to vector<1x128xf32>
    %43 = arith.divf %39, %42 : vector<1x128xf32>
    %44 = vector.shape_cast %43 : vector<1x128xf32> to vector<1x1x128xf32>
    %c0_19 = arith.constant 0 : index
    %c0_20 = arith.constant 0 : index
    %c0_21 = arith.constant 0 : index
    %45 = vector.load %arg6[%c0_19, %c0_20, %c0_21] : memref<1x1x128xf32, #tpu.memory_space<vmem>>, vector<1x1x128xf32>
    tpu.vector_store %arg6[%c0_19, %c0_20, %c0_21], %44 {strides = array<i32>} : memref<1x1x128xf32, #tpu.memory_space<vmem>>, vector<1x1x128xf32>,
    return
  }
  func.func @transform_0(%arg0: i32) -> (i32, i32, i32, i32) {
    %c0_i32 = arith.constant 0 : i32
    %c0_i32_0 = arith.constant 0 : i32
    %c0_i32_1 = arith.constant 0 : i32
    %c0_i32_2 = arith.constant 0 : i32
    return %arg0, %c0_i32, %c0_i32_0, %c0_i32_1 : i32, i32, i32, i32
  }
  func.func @transform_1(%arg0: i32) -> (i32, i32) {
    %c0_i32 = arith.constant 0 : i32
    %c0_i32_0 = arith.constant 0 : i32
    %c0_i32_1 = arith.constant 0 : i32
    return %c0_i32, %c0_i32_0 : i32, i32
  }
  func.func @transform_2(%arg0: i32) -> (i32, i32) {
    %c0_i32 = arith.constant 0 : i32
    %c0_i32_0 = arith.constant 0 : i32
    %c0_i32_1 = arith.constant 0 : i32
    return %c0_i32, %c0_i32_0 : i32, i32
  }
  func.func @transform_3(%arg0: i32) -> (i32, i32) {
    %c0_i32 = arith.constant 0 : i32
    %c0_i32_0 = arith.constant 0 : i32
    %c0_i32_1 = arith.constant 0 : i32
    return %c0_i32, %c0_i32_0 : i32, i32
  }
  func.func @transform_4(%arg0: i32) -> (i32, i32) {
    %c0_i32 = arith.constant 0 : i32
    %c0_i32_0 = arith.constant 0 : i32
    %c0_i32_1 = arith.constant 0 : i32
    return %c0_i32, %c0_i32_0 : i32, i32
  }
  func.func @transform_5(%arg0: i32) -> (i32, i32, i32) {
    %c0_i32 = arith.constant 0 : i32
    %c0_i32_0 = arith.constant 0 : i32
    %c0_i32_1 = arith.constant 0 : i32
    return %arg0, %c0_i32, %c0_i32_0 : i32, i32, i32
  }
}

</mosaic_0001>

<llo_original>
// kernel: tpu_custom_call.1
$region0: #{tpu_custom_call.1}
  #allocation0 [shape = 'u32[]', space=smem, size = 0x4, offset = 0x4, fixed_abs, tag = 'smem constant byte address 0x4 - core index']
  #allocation1 [shape = 'u32[144,128]{1,0:T(1,128)}', space=vmem, size = 0x12000, scoped, tag = 'internal scratch']
  %s0 = inlined_call_operand.vmem [shape: bf16[2,18,18,8], index: 0, kind: input, shape index: {}]
  %s1 = inlined_call_operand.vmem [shape: bf16[128,128], index: 1, kind: input, shape index: {}]
  %s2 = inlined_call_operand.vmem [shape: f32[1,128], index: 2, kind: input, shape index: {}]
  %s3 = inlined_call_operand.vmem [shape: bf16[128,128], index: 3, kind: input, shape index: {}]
  %s4 = inlined_call_operand.vmem [shape: f32[1,128], index: 4, kind: input, shape index: {}]
  %s5 = inlined_call_operand.hbm [shape: f32[2,1,128], index: 5, kind: output, shape index: {}]
  %s6 = sld [smem:[#allocation0]]
  $region53: #{tpu_custom_call.1} parent=0
    _
  %s8 = ssub.s32 1, %s6
  %s9 = scalar_select 0, %s8, %s6
  $region1: #{tpu_custom_call.1} parent=0
    #allocation2 [shape = 'u8[1024]{0}', space=vmem, size = 0x400, scoped, tag = 'output window, operand 0']
    #allocation3 [shape = 's32[2]{0}', space=sflag, size = 0x8, scoped, tag = 'scoped memory for tpu_custom_call.1']
    %10 = vsyncpa [#allocation3], 0
    %s11 = scalar_lea.sflag [#allocation3], 1
    %12 = vsyncpa %s11, 0
    loop: start=0, step=1, limit=4
    $region2: #{tpu_custom_call.1} parent=1 // loop_pre_header
      _
    $region3: #{tpu_custom_call.1} parent=1 // loop_header
      %s14 = sphi 0, %s18
      %p15 = scmp.ge.s32.totalorder %s14, 4
      %s24 = sphi 0, %s26
      %s27 = sphi 0, %s24
      %s28 = sphi 0, %s27
      %s44 = sphi 0, %s28
      %s48 = sphi 0, %s48
      %s50 = sphi 0, %s48
      %s51 = sphi 0, %s50
      %s65 = sphi 0, %s51
      %s69 = sphi 0, %s69
      %s71 = sphi 0, %s69
      %s72 = sphi 0, %s71
      %s86 = sphi 0, %s72
      %s90 = sphi 0, %s90
      %s92 = sphi 0, %s90
      %s93 = sphi 0, %s92
      %s107 = sphi 0, %s93
      %s111 = sphi 0, %s111
      %s113 = sphi 0, %s111
      %s114 = sphi 0, %s113
      %s128 = sphi 0, %s114
      %s134 = sphi 0, %s136
      %s137 = sphi 0, %s134
      %s138 = sphi 0, %s137
      %s154 = sphi 0, %s138
    $region4: #{tpu_custom_call.1} parent=1 // loop_header_branch
      %17 = sbr.rel (%p15) target = $region8
    $region5: #{tpu_custom_call.1} parent=1 // loop_body
      %s19 = ssub.s32 %s14, 1
      %s20 = ssub.s32 %s14, 2
      %s21 = sadd.s32 %s14, 1
      %s22 = ssub.s32 %s14, %s21
      %p23 = scmp.eq.s32.totalorder %s22, 0
      %s25 = sadd.s32 %s24, 1
      %s26 = scalar_select %p23, %s24, %s25
      %p29 = pneg %p23
      %p30 = scmp.eq.s32.totalorder %s14, 1
      %p31 = por %p29, %p30
      %p32 = scmp.ne.s32.totalorder %s24, %s27
      %p33 = scmp.eq.s32.totalorder %s14, 0
      %p34 = por %p32, %p33
      %p35 = scmp.ne.s32.totalorder %s24, %s27
      %p36 = scmp.eq.s32.totalorder %s19, 1
      %p37 = por %p35, %p36
      %p38 = scmp.ne.s32.totalorder %s27, %s28
      %p39 = scmp.eq.s32.totalorder %s19, 0
      %p40 = por %p38, %p39
      %p41 = scmp.ne.s32.totalorder %s27, %s28
      %p42 = scmp.eq.s32.totalorder %s20, 1
      %p43 = por %p41, %p42
      %p45 = scmp.ne.s32.totalorder %s28, %s44
      %p46 = scmp.eq.s32.totalorder %s20, 0
      %p47 = por %p45, %p46
      %s49 = sadd.s32 %s48, 1
      %p52 = scmp.eq.s32.totalorder %s14, 1
      %p53 = scmp.ne.s32.totalorder %s48, %s50
      %p54 = scmp.eq.s32.totalorder %s14, 0
      %p55 = por %p53, %p54
      %p56 = scmp.ne.s32.totalorder %s48, %s50
      %p57 = scmp.eq.s32.totalorder %s19, 1
      %p58 = por %p56, %p57
      %p59 = scmp.ne.s32.totalorder %s50, %s51
      %p60 = scmp.eq.s32.totalorder %s19, 0
      %p61 = por %p59, %p60
      %p62 = scmp.ne.s32.totalorder %s50, %s51
      %p63 = scmp.eq.s32.totalorder %s20, 1
      %p64 = por %p62, %p63
      %p66 = scmp.ne.s32.totalorder %s51, %s65
      %p67 = scmp.eq.s32.totalorder %s20, 0
      %p68 = por %p66, %p67
      %s70 = sadd.s32 %s69, 1
      %p73 = scmp.eq.s32.totalorder %s14, 1
      %p74 = scmp.ne.s32.totalorder %s69, %s71
      %p75 = scmp.eq.s32.totalorder %s14, 0
      %p76 = por %p74, %p75
      %p77 = scmp.ne.s32.totalorder %s69, %s71
      %p78 = scmp.eq.s32.totalorder %s19, 1
      %p79 = por %p77, %p78
      %p80 = scmp.ne.s32.totalorder %s71, %s72
      %p81 = scmp.eq.s32.totalorder %s19, 0
      %p82 = por %p80, %p81
      %p83 = scmp.ne.s32.totalorder %s71, %s72
      %p84 = scmp.eq.s32.totalorder %s20, 1
      %p85 = por %p83, %p84
      %p87 = scmp.ne.s32.totalorder %s72, %s86
      %p88 = scmp.eq.s32.totalorder %s20, 0
      %p89 = por %p87, %p88
      %s91 = sadd.s32 %s90, 1
      %p94 = scmp.eq.s32.totalorder %s14, 1
      %p95 = scmp.ne.s32.totalorder %s90, %s92
      %p96 = scmp.eq.s32.totalorder %s14, 0
      %p97 = por %p95, %p96
      %p98 = scmp.ne.s32.totalorder %s90, %s92
      %p99 = scmp.eq.s32.totalorder %s19, 1
      %p100 = por %p98, %p99
      %p101 = scmp.ne.s32.totalorder %s92, %s93
      %p102 = scmp.eq.s32.totalorder %s19, 0
      %p103 = por %p101, %p102
      %p104 = scmp.ne.s32.totalorder %s92, %s93
      %p105 = scmp.eq.s32.totalorder %s20, 1
      %p106 = por %p104, %p105
      %p108 = scmp.ne.s32.totalorder %s93, %s107
      %p109 = scmp.eq.s32.totalorder %s20, 0
      %p110 = por %p108, %p109
      %s112 = sadd.s32 %s111, 1
      %p115 = scmp.eq.s32.totalorder %s14, 1
      %p116 = scmp.ne.s32.totalorder %s111, %s113
      %p117 = scmp.eq.s32.totalorder %s14, 0
      %p118 = por %p116, %p117
      %p119 = scmp.ne.s32.totalorder %s111, %s113
      %p120 = scmp.eq.s32.totalorder %s19, 1
      %p121 = por %p119, %p120
      %p122 = scmp.ne.s32.totalorder %s113, %s114
      %p123 = scmp.eq.s32.totalorder %s19, 0
      %p124 = por %p122, %p123
      %p125 = scmp.ne.s32.totalorder %s113, %s114
      %p126 = scmp.eq.s32.totalorder %s20, 1
      %p127 = por %p125, %p126
      %p129 = scmp.ne.s32.totalorder %s114, %s128
      %p130 = scmp.eq.s32.totalorder %s20, 0
      %p131 = por %p129, %p130
      %s132 = ssub.s32 %s14, %s21
      %p133 = scmp.eq.s32.totalorder %s132, 0
      %s135 = sadd.s32 %s134, 1
      %s136 = scalar_select %p133, %s134, %s135
      %p139 = pneg %p133
      %p140 = scmp.eq.s32.totalorder %s14, 1
      %p141 = por %p139, %p140
      %p142 = scmp.ne.s32.totalorder %s134, %s137
      %p143 = scmp.eq.s32.totalorder %s14, 0
      %p144 = por %p142, %p143
      %p145 = scmp.ne.s32.totalorder %s134, %s137
      %p146 = scmp.eq.s32.totalorder %s19, 1
      %p147 = por %p145, %p146
      %p148 = scmp.ne.s32.totalorder %s137, %s138
      %p149 = scmp.eq.s32.totalorder %s19, 0
      %p150 = por %p148, %p149
      %p151 = scmp.ne.s32.totalorder %s137, %s138
      %p152 = scmp.eq.s32.totalorder %s20, 1
      %p153 = por %p151, %p152
      %p155 = scmp.ne.s32.totalorder %s138, %s154
      %p156 = scmp.eq.s32.totalorder %s20, 0
      %p157 = por %p155, %p156
      %p158 = scmp.le.s32.totalorder 1, %s14
      %p159 = scmp.lt.s32.totalorder %s14, 3
      %p160 = pnand %p158, %p159
      %p161 = pneg %p160
      // Predicated region
      $region9: #{tpu_custom_call.1} parent=5 // pred_check
        _
      $region10: #{tpu_custom_call.1} parent=5 // pred_check_branch
        %163 = sbr.rel (%p160) target = $region12
      $region11: #{tpu_custom_call.1} parent=5 // pred_region
        %s164 = ssub.s32 %s14, 1
        // Predicated region
        $region13: #{tpu_custom_call.1} parent=11 // pred_check
          %p165 = pneg %p61
        $region14: #{tpu_custom_call.1} parent=11 // pred_check_branch
          %167 = sbr.rel (%p165) target = $region16
        $region15: #{tpu_custom_call.1} parent=11 // pred_region
          _
        $region16: #{tpu_custom_call.1} parent=11 // pred_fallthru
          _
        // Predicated region
        $region17: #{tpu_custom_call.1} parent=11 // pred_check
          %p168 = pneg %p82
        $region18: #{tpu_custom_call.1} parent=11 // pred_check_branch
          %170 = sbr.rel (%p168) target = $region20
        $region19: #{tpu_custom_call.1} parent=11 // pred_region
          _
        $region20: #{tpu_custom_call.1} parent=11 // pred_fallthru
          _
        // Predicated region
        $region21: #{tpu_custom_call.1} parent=11 // pred_check
          %p171 = pneg %p103
        $region22: #{tpu_custom_call.1} parent=11 // pred_check_branch
          %173 = sbr.rel (%p171) target = $region24
        $region23: #{tpu_custom_call.1} parent=11 // pred_region
          _
        $region24: #{tpu_custom_call.1} parent=11 // pred_fallthru
          _
        // Predicated region
        $region25: #{tpu_custom_call.1} parent=11 // pred_check
          %p174 = pneg %p124
        $region26: #{tpu_custom_call.1} parent=11 // pred_check_branch
          %176 = sbr.rel (%p174) target = $region28
        $region27: #{tpu_custom_call.1} parent=11 // pred_region
          _
        $region28: #{tpu_custom_call.1} parent=11 // pred_fallthru
          _
      $region12: #{tpu_custom_call.1} parent=5 // pred_fallthru
        _
      %p177 = scmp.lt.s32.totalorder %s14, 2
      // Predicated region
      $region29: #{tpu_custom_call.1} parent=5 // pred_check
        %p178 = pneg %p177
      $region30: #{tpu_custom_call.1} parent=5 // pred_check_branch
        %180 = sbr.rel (%p178) target = $region32
      $region31: #{tpu_custom_call.1} parent=5 // pred_region
        // Predicated region
        $region33: #{tpu_custom_call.1} parent=31 // pred_check
          %p181 = pneg %p34
        $region34: #{tpu_custom_call.1} parent=31 // pred_check_branch
          %183 = sbr.rel (%p181) target = $region36
        $region35: #{tpu_custom_call.1} parent=31 // pred_region
          %p184 = scmp.lt.s32.totalorder %s14, 1
          %s185 = scalar_select %p184, %s14, 1
          %s186 = smul.addr %s185, 54
          %s187 = smul.addr %s186, 4
          %s188 = scalar_lea.vmem %s0, %s187
        $region36: #{tpu_custom_call.1} parent=31 // pred_fallthru
          _
      $region32: #{tpu_custom_call.1} parent=5 // pred_fallthru
        _
      %p189 = scmp.le.s32.totalorder 1, %s14
      %p190 = scmp.lt.s32.totalorder %s14, 3
      %p191 = pnand %p189, %p190
      %p192 = pneg %p191
      // Predicated region
      $region37: #{tpu_custom_call.1} parent=5 // pred_check
        _
      $region38: #{tpu_custom_call.1} parent=5 // pred_check_branch
        %194 = sbr.rel (%p191) target = $region40
      $region39: #{tpu_custom_call.1} parent=5 // pred_region
        %s195 = ssub.s32 %s14, 1
        %p196 = scmp.lt.s32.totalorder %s19, 1
        %s197 = scalar_select %p196, %s19, 1
        %s198 = smul.addr %s197, 54
        %s199 = smul.addr %s198, 4
        %s200 = scalar_lea.vmem %s0, %s199
        %p201 = pneg %p40
        %p202 = pneg %p37
        %p203 = pneg %p61
        %p204 = pneg %p58
        %p205 = pneg %p82
        %p206 = pneg %p79
        %p207 = pneg %p103
        %p208 = pneg %p100
        %p209 = pneg %p124
        %p210 = pneg %p121
        %p211 = pneg %p150
        %p212 = pneg %p147
        %s213 = sand.u32 %s137, 1
        %s214 = scalar_lea.sflag [#allocation3], %s213
        %s215 = sand.u32 %s137, 1
        %s216 = scalar_lea.vmem [#allocation2], %s215
        %p217 = scmp.lt.s32.totalorder %s19, 1
        %s218 = scalar_select %p217, %s19, 1
        %s219 = smul.addr %s218, 54
        %s220 = smul.addr %s219, 4
        %s221 = scalar_lea.vmem %s0, %s220
        %v223 = vld [vmem:[%s221] sm:$0xf]
        %v224 = vld [vmem:[%s221 + $0x4] sm:$0xf]
        %v225 = vld [vmem:[%s221 + $0x8] sm:$0x1]
        %v226 = vld [vmem:[%s221 + $0xc] sm:$0xf]
        %v227 = vld [vmem:[%s221 + $0x10] sm:$0xf]
        %v228 = vld [vmem:[%s221 + $0x14] sm:$0x1]
        %v229 = vld [vmem:[%s221 + $0x18] sm:$0xf]
        %v230 = vld [vmem:[%s221 + $0x1c] sm:$0xf]
        %v231 = vld [vmem:[%s221 + $0x20] sm:$0x1]
        %v232 = vld [vmem:[%s221 + $0x24] sm:$0xf]
        %v233 = vld [vmem:[%s221 + $0x28] sm:$0xf]
        %v234 = vld [vmem:[%s221 + $0x2c] sm:$0x1]
        %v235 = vld [vmem:[%s221 + $0x30] sm:$0xf]
        %v236 = vld [vmem:[%s221 + $0x34] sm:$0xf]
        %v237 = vld [vmem:[%s221 + $0x38] sm:$0x1]
        %v238 = vld [vmem:[%s221 + $0x3c] sm:$0xf]
        %v239 = vld [vmem:[%s221 + $0x40] sm:$0xf]
        %v240 = vld [vmem:[%s221 + $0x44] sm:$0x1]
        %v241 = vld [vmem:[%s221 + $0x48] sm:$0xf]
        %v242 = vld [vmem:[%s221 + $0x4c] sm:$0xf]
        %v243 = vld [vmem:[%s221 + $0x50] sm:$0x1]
        %v244 = vld [vmem:[%s221 + $0x54] sm:$0xf]
        %v245 = vld [vmem:[%s221 + $0x58] sm:$0xf]
        %v246 = vld [vmem:[%s221 + $0x5c] sm:$0x1]
        %v247 = vld [vmem:[%s221 + $0x60] sm:$0xf]
        %v248 = vld [vmem:[%s221 + $0x64] sm:$0xf]
        %v249 = vld [vmem:[%s221 + $0x68] sm:$0x1]
        %v250 = vld [vmem:[%s221 + $0x6c] sm:$0xf]
        %v251 = vld [vmem:[%s221 + $0x70] sm:$0xf]
        %v252 = vld [vmem:[%s221 + $0x74] sm:$0x1]
        %v253 = vld [vmem:[%s221 + $0x78] sm:$0xf]
        %v254 = vld [vmem:[%s221 + $0x7c] sm:$0xf]
        %v255 = vld [vmem:[%s221 + $0x80] sm:$0x1]
        %v256 = vld [vmem:[%s221 + $0x84] sm:$0xf]
        %v257 = vld [vmem:[%s221 + $0x88] sm:$0xf]
        %v258 = vld [vmem:[%s221 + $0x8c] sm:$0x1]
        %v259 = vld [vmem:[%s221 + $0x90] sm:$0xf]
        %v260 = vld [vmem:[%s221 + $0x94] sm:$0xf]
        %v261 = vld [vmem:[%s221 + $0x98] sm:$0x1]
        %v262 = vld [vmem:[%s221 + $0x9c] sm:$0xf]
        %v263 = vld [vmem:[%s221 + $0xa0] sm:$0xf]
        %v264 = vld [vmem:[%s221 + $0xa4] sm:$0x1]
        %v265 = vld [vmem:[%s221 + $0xa8] sm:$0xf]
        %v266 = vld [vmem:[%s221 + $0xac] sm:$0xf]
        %v267 = vld [vmem:[%s221 + $0xb0] sm:$0x1]
        %v268 = vld [vmem:[%s221 + $0xb4] sm:$0xf]
        %v269 = vld [vmem:[%s221 + $0xb8] sm:$0xf]
        %v270 = vld [vmem:[%s221 + $0xbc] sm:$0x1]
        %v271 = vld [vmem:[%s221 + $0xc0] sm:$0xf]
        %v272 = vld [vmem:[%s221 + $0xc4] sm:$0xf]
        %v273 = vld [vmem:[%s221 + $0xc8] sm:$0x1]
        %v274 = vld [vmem:[%s221 + $0xcc] sm:$0xf]
        %v275 = vld [vmem:[%s221 + $0xd0] sm:$0xf]
        %v276 = vld [vmem:[%s221 + $0xd4] sm:$0x1]
        %v309 = vunpack.c.l.b16 %v223
        %v310 = vunpack.c.l.b16 %v224
        %v311 = vunpack.c.l.b16 %v226
        %v312 = vunpack.c.l.b16 %v227
        %v313 = vunpack.c.l.b16 %v229
        %v314 = vunpack.c.l.b16 %v230
        %v315 = vunpack.c.l.b16 %v232
        %v316 = vunpack.c.l.b16 %v233
        %v317 = vunpack.c.l.b16 %v235
        %v318 = vunpack.c.l.b16 %v236
        %v319 = vunpack.c.l.b16 %v238
        %v320 = vunpack.c.l.b16 %v239
        %v321 = vunpack.c.l.b16 %v241
        %v322 = vunpack.c.l.b16 %v242
        %v323 = vunpack.c.l.b16 %v244
        %v324 = vunpack.c.l.b16 %v245
        %v325 = vunpack.c.l.b16 %v247
        %v326 = vunpack.c.l.b16 %v248
        %v327 = vunpack.c.l.b16 %v250
        %v328 = vunpack.c.l.b16 %v251
        %v329 = vunpack.c.l.b16 %v253
        %v330 = vunpack.c.l.b16 %v254
        %v331 = vunpack.c.l.b16 %v256
        %v332 = vunpack.c.l.b16 %v257
        %v333 = vunpack.c.l.b16 %v259
        %v334 = vunpack.c.l.b16 %v260
        %v335 = vunpack.c.l.b16 %v262
        %v336 = vunpack.c.l.b16 %v263
        %v337 = vunpack.c.l.b16 %v265
        %v338 = vunpack.c.l.b16 %v266
        %v339 = vunpack.c.l.b16 %v268
        %v340 = vunpack.c.l.b16 %v269
        %v341 = vpack.c.b16 %v310, %v309
        %v342 = vpack.c.b16 %v312, %v311
        %v343 = vpack.c.b16 %v314, %v313
        %v344 = vpack.c.b16 %v316, %v315
        %v345 = vpack.c.b16 %v318, %v317
        %v346 = vpack.c.b16 %v320, %v319
        %v347 = vpack.c.b16 %v322, %v321
        %v348 = vpack.c.b16 %v324, %v323
        %v349 = vpack.c.b16 %v326, %v325
        %v350 = vpack.c.b16 %v328, %v327
        %v351 = vpack.c.b16 %v330, %v329
        %v352 = vpack.c.b16 %v332, %v331
        %v353 = vpack.c.b16 %v334, %v333
        %v354 = vpack.c.b16 %v336, %v335
        %v355 = vpack.c.b16 %v338, %v337
        %v356 = vpack.c.b16 %v340, %v339
        %v373 = vunpack.c.l.b16 %v225
        %v374 = vunpack.c.l.b16 %v228
        %v375 = vunpack.c.l.b16 %v231
        %v376 = vunpack.c.l.b16 %v234
        %v377 = vunpack.c.l.b16 %v237
        %v378 = vunpack.c.l.b16 %v240
        %v379 = vunpack.c.l.b16 %v243
        %v380 = vunpack.c.l.b16 %v246
        %v381 = vunpack.c.l.b16 %v249
        %v382 = vunpack.c.l.b16 %v252
        %v383 = vunpack.c.l.b16 %v255
        %v384 = vunpack.c.l.b16 %v258
        %v385 = vunpack.c.l.b16 %v261
        %v386 = vunpack.c.l.b16 %v264
        %v387 = vunpack.c.l.b16 %v267
        %v388 = vunpack.c.l.b16 %v270
        %v389 = vpack.c.b16 %v373, %v373
        %v390 = vpack.c.b16 %v374, %v374
        %v391 = vpack.c.b16 %v375, %v375
        %v392 = vpack.c.b16 %v376, %v376
        %v393 = vpack.c.b16 %v377, %v377
        %v394 = vpack.c.b16 %v378, %v378
        %v395 = vpack.c.b16 %v379, %v379
        %v396 = vpack.c.b16 %v380, %v380
        %v397 = vpack.c.b16 %v381, %v381
        %v398 = vpack.c.b16 %v382, %v382
        %v399 = vpack.c.b16 %v383, %v383
        %v400 = vpack.c.b16 %v384, %v384
        %v401 = vpack.c.b16 %v385, %v385
        %v402 = vpack.c.b16 %v386, %v386
        %v403 = vpack.c.b16 %v387, %v387
        %v404 = vpack.c.b16 %v388, %v388
        %vm405 = vsmask.f32 7424
        %v407 = vshrl.u32 %v341, 16
        %v409 = vshll.u32 %v341, 16
        %v411 = vrot.slane %v409, 1
        %v412 = vor.u32 %v407, %v411
        %v414 = vshll.u32 %v389, 16
        %v416 = vrot.slane %v414, 1
        %v417 = vsel %vm405, %v412, %v416
        %v419 = vshrl.u32 %v342, 16
        %v421 = vshll.u32 %v342, 16
        %v423 = vrot.slane %v421, 1
        %v424 = vor.u32 %v419, %v423
        %v426 = vshll.u32 %v390, 16
        %v428 = vrot.slane %v426, 1
        %v429 = vsel %vm405, %v424, %v428
        %v431 = vshrl.u32 %v343, 16
        %v433 = vshll.u32 %v343, 16
        %v435 = vrot.slane %v433, 1
        %v436 = vor.u32 %v431, %v435
        %v438 = vshll.u32 %v391, 16
        %v440 = vrot.slane %v438, 1
        %v441 = vsel %vm405, %v436, %v440
        %v443 = vshrl.u32 %v344, 16
        %v445 = vshll.u32 %v344, 16
        %v447 = vrot.slane %v445, 1
        %v448 = vor.u32 %v443, %v447
        %v450 = vshll.u32 %v392, 16
        %v452 = vrot.slane %v450, 1
        %v453 = vsel %vm405, %v448, %v452
        %v455 = vshrl.u32 %v345, 16
        %v457 = vshll.u32 %v345, 16
        %v459 = vrot.slane %v457, 1
        %v460 = vor.u32 %v455, %v459
        %v462 = vshll.u32 %v393, 16
        %v464 = vrot.slane %v462, 1
        %v465 = vsel %vm405, %v460, %v464
        %v467 = vshrl.u32 %v346, 16
        %v469 = vshll.u32 %v346, 16
        %v471 = vrot.slane %v469, 1
        %v472 = vor.u32 %v467, %v471
        %v474 = vshll.u32 %v394, 16
        %v476 = vrot.slane %v474, 1
        %v477 = vsel %vm405, %v472, %v476
        %v479 = vshrl.u32 %v347, 16
        %v481 = vshll.u32 %v347, 16
        %v483 = vrot.slane %v481, 1
        %v484 = vor.u32 %v479, %v483
        %v486 = vshll.u32 %v395, 16
        %v488 = vrot.slane %v486, 1
        %v489 = vsel %vm405, %v484, %v488
        %v491 = vshrl.u32 %v348, 16
        %v493 = vshll.u32 %v348, 16
        %v495 = vrot.slane %v493, 1
        %v496 = vor.u32 %v491, %v495
        %v498 = vshll.u32 %v396, 16
        %v500 = vrot.slane %v498, 1
        %v501 = vsel %vm405, %v496, %v500
        %v503 = vshrl.u32 %v349, 16
        %v505 = vshll.u32 %v349, 16
        %v507 = vrot.slane %v505, 1
        %v508 = vor.u32 %v503, %v507
        %v510 = vshll.u32 %v397, 16
        %v512 = vrot.slane %v510, 1
        %v513 = vsel %vm405, %v508, %v512
        %v515 = vshrl.u32 %v350, 16
        %v517 = vshll.u32 %v350, 16
        %v519 = vrot.slane %v517, 1
        %v520 = vor.u32 %v515, %v519
        %v522 = vshll.u32 %v398, 16
        %v524 = vrot.slane %v522, 1
        %v525 = vsel %vm405, %v520, %v524
        %v527 = vshrl.u32 %v351, 16
        %v529 = vshll.u32 %v351, 16
        %v531 = vrot.slane %v529, 1
        %v532 = vor.u32 %v527, %v531
        %v534 = vshll.u32 %v399, 16
        %v536 = vrot.slane %v534, 1
        %v537 = vsel %vm405, %v532, %v536
        %v539 = vshrl.u32 %v352, 16
        %v541 = vshll.u32 %v352, 16
        %v543 = vrot.slane %v541, 1
        %v544 = vor.u32 %v539, %v543
        %v546 = vshll.u32 %v400, 16
        %v548 = vrot.slane %v546, 1
        %v549 = vsel %vm405, %v544, %v548
        %v551 = vshrl.u32 %v353, 16
        %v553 = vshll.u32 %v353, 16
        %v555 = vrot.slane %v553, 1
        %v556 = vor.u32 %v551, %v555
        %v558 = vshll.u32 %v401, 16
        %v560 = vrot.slane %v558, 1
        %v561 = vsel %vm405, %v556, %v560
        %v563 = vshrl.u32 %v354, 16
        %v565 = vshll.u32 %v354, 16
        %v567 = vrot.slane %v565, 1
        %v568 = vor.u32 %v563, %v567
        %v570 = vshll.u32 %v402, 16
        %v572 = vrot.slane %v570, 1
        %v573 = vsel %vm405, %v568, %v572
        %v575 = vshrl.u32 %v355, 16
        %v577 = vshll.u32 %v355, 16
        %v579 = vrot.slane %v577, 1
        %v580 = vor.u32 %v575, %v579
        %v582 = vshll.u32 %v403, 16
        %v584 = vrot.slane %v582, 1
        %v585 = vsel %vm405, %v580, %v584
        %v587 = vshrl.u32 %v356, 16
        %v589 = vshll.u32 %v356, 16
        %v591 = vrot.slane %v589, 1
        %v592 = vor.u32 %v587, %v591
        %v594 = vshll.u32 %v404, 16
        %v596 = vrot.slane %v594, 1
        %v597 = vsel %vm405, %v592, %v596
        %598 = vrot.lane.b32.xlu0 %v417, 8
        %v599 = vpop.permute.xlu0 %598
        %600 = vrot.lane.b32.xlu0 %v429, 8
        %v601 = vpop.permute.xlu0 %600
        %602 = vrot.lane.b32.xlu0 %v441, 8
        %v603 = vpop.permute.xlu0 %602
        %604 = vrot.lane.b32.xlu0 %v453, 8
        %v605 = vpop.permute.xlu0 %604
        %606 = vrot.lane.b32.xlu0 %v465, 8
        %v607 = vpop.permute.xlu0 %606
        %608 = vrot.lane.b32.xlu0 %v477, 8
        %v609 = vpop.permute.xlu0 %608
        %610 = vrot.lane.b32.xlu0 %v489, 8
        %v611 = vpop.permute.xlu0 %610
        %612 = vrot.lane.b32.xlu0 %v501, 8
        %v613 = vpop.permute.xlu0 %612
        %614 = vrot.lane.b32.xlu0 %v513, 8
        %v615 = vpop.permute.xlu0 %614
        %616 = vrot.lane.b32.xlu0 %v525, 8
        %v617 = vpop.permute.xlu0 %616
        %618 = vrot.lane.b32.xlu0 %v537, 8
        %v619 = vpop.permute.xlu0 %618
        %620 = vrot.lane.b32.xlu0 %v549, 8
        %v621 = vpop.permute.xlu0 %620
        %622 = vrot.lane.b32.xlu0 %v561, 8
        %v623 = vpop.permute.xlu0 %622
        %624 = vrot.lane.b32.xlu0 %v573, 8
        %v625 = vpop.permute.xlu0 %624
        %626 = vrot.lane.b32.xlu0 %v585, 8
        %v627 = vpop.permute.xlu0 %626
        %628 = vrot.lane.b32.xlu0 %v597, 8
        %v629 = vpop.permute.xlu0 %628
        %vm630 = vcmask 1046528
        %v631 = vrot.slane %v341, 1
        %v632 = vrot.slane %v389, 1
        %v633 = vsel %vm630, %v631, %v632
        %v634 = vrot.slane %v342, 1
        %v635 = vrot.slane %v390, 1
        %v636 = vsel %vm630, %v634, %v635
        %v637 = vrot.slane %v343, 1
        %v638 = vrot.slane %v391, 1
        %v639 = vsel %vm630, %v637, %v638
        %v640 = vrot.slane %v344, 1
        %v641 = vrot.slane %v392, 1
        %v642 = vsel %vm630, %v640, %v641
        %v643 = vrot.slane %v345, 1
        %v644 = vrot.slane %v393, 1
        %v645 = vsel %vm630, %v643, %v644
        %v646 = vrot.slane %v346, 1
        %v647 = vrot.slane %v394, 1
        %v648 = vsel %vm630, %v646, %v647
        %v649 = vrot.slane %v347, 1
        %v650 = vrot.slane %v395, 1
        %v651 = vsel %vm630, %v649, %v650
        %v652 = vrot.slane %v348, 1
        %v653 = vrot.slane %v396, 1
        %v654 = vsel %vm630, %v652, %v653
        %v655 = vrot.slane %v349, 1
        %v656 = vrot.slane %v397, 1
        %v657 = vsel %vm630, %v655, %v656
        %v658 = vrot.slane %v350, 1
        %v659 = vrot.slane %v398, 1
        %v660 = vsel %vm630, %v658, %v659
        %v661 = vrot.slane %v351, 1
        %v662 = vrot.slane %v399, 1
        %v663 = vsel %vm630, %v661, %v662
        %v664 = vrot.slane %v352, 1
        %v665 = vrot.slane %v400, 1
        %v666 = vsel %vm630, %v664, %v665
        %v667 = vrot.slane %v353, 1
        %v668 = vrot.slane %v401, 1
        %v669 = vsel %vm630, %v667, %v668
        %v670 = vrot.slane %v354, 1
        %v671 = vrot.slane %v402, 1
        %v672 = vsel %vm630, %v670, %v671
        %v673 = vrot.slane %v355, 1
        %v674 = vrot.slane %v403, 1
        %v675 = vsel %vm630, %v673, %v674
        %v676 = vrot.slane %v356, 1
        %v677 = vrot.slane %v404, 1
        %v678 = vsel %vm630, %v676, %v677
        %679 = vrot.lane.b32.xlu0 %v633, 16
        %v680 = vpop.permute.xlu0 %679
        %681 = vrot.lane.b32.xlu0 %v636, 16
        %v682 = vpop.permute.xlu0 %681
        %683 = vrot.lane.b32.xlu0 %v639, 16
        %v684 = vpop.permute.xlu0 %683
        %685 = vrot.lane.b32.xlu0 %v642, 16
        %v686 = vpop.permute.xlu0 %685
        %687 = vrot.lane.b32.xlu0 %v645, 16
        %v688 = vpop.permute.xlu0 %687
        %689 = vrot.lane.b32.xlu0 %v648, 16
        %v690 = vpop.permute.xlu0 %689
        %691 = vrot.lane.b32.xlu0 %v651, 16
        %v692 = vpop.permute.xlu0 %691
        %693 = vrot.lane.b32.xlu0 %v654, 16
        %v694 = vpop.permute.xlu0 %693
        %695 = vrot.lane.b32.xlu0 %v657, 16
        %v696 = vpop.permute.xlu0 %695
        %697 = vrot.lane.b32.xlu0 %v660, 16
        %v698 = vpop.permute.xlu0 %697
        %699 = vrot.lane.b32.xlu0 %v663, 16
        %v700 = vpop.permute.xlu0 %699
        %701 = vrot.lane.b32.xlu0 %v666, 16
        %v702 = vpop.permute.xlu0 %701
        %703 = vrot.lane.b32.xlu0 %v669, 16
        %v704 = vpop.permute.xlu0 %703
        %705 = vrot.lane.b32.xlu0 %v672, 16
        %v706 = vpop.permute.xlu0 %705
        %707 = vrot.lane.b32.xlu0 %v675, 16
        %v708 = vpop.permute.xlu0 %707
        %709 = vrot.lane.b32.xlu0 %v678, 16
        %v710 = vpop.permute.xlu0 %709
        %v713 = vunpack.c.l.b16 %v271
        %v714 = vunpack.c.l.b16 %v272
        %v715 = vpack.c.b16 %v714, %v713
        %716 = vrot.lane.b32.xlu0 %v342, 24
        %v717 = vpop.permute.xlu0 %716
        %718 = vrot.lane.b32.xlu0 %v343, 24
        %v719 = vpop.permute.xlu0 %718
        %720 = vrot.lane.b32.xlu0 %v344, 24
        %v721 = vpop.permute.xlu0 %720
        %722 = vrot.lane.b32.xlu0 %v345, 24
        %v723 = vpop.permute.xlu0 %722
        %724 = vrot.lane.b32.xlu0 %v346, 24
        %v725 = vpop.permute.xlu0 %724
        %726 = vrot.lane.b32.xlu0 %v347, 24
        %v727 = vpop.permute.xlu0 %726
        %728 = vrot.lane.b32.xlu0 %v348, 24
        %v729 = vpop.permute.xlu0 %728
        %730 = vrot.lane.b32.xlu0 %v349, 24
        %v731 = vpop.permute.xlu0 %730
        %732 = vrot.lane.b32.xlu0 %v350, 24
        %v733 = vpop.permute.xlu0 %732
        %734 = vrot.lane.b32.xlu0 %v351, 24
        %v735 = vpop.permute.xlu0 %734
        %736 = vrot.lane.b32.xlu0 %v352, 24
        %v737 = vpop.permute.xlu0 %736
        %738 = vrot.lane.b32.xlu0 %v353, 24
        %v739 = vpop.permute.xlu0 %738
        %740 = vrot.lane.b32.xlu0 %v354, 24
        %v741 = vpop.permute.xlu0 %740
        %742 = vrot.lane.b32.xlu0 %v355, 24
        %v743 = vpop.permute.xlu0 %742
        %744 = vrot.lane.b32.xlu0 %v356, 24
        %v745 = vpop.permute.xlu0 %744
        %746 = vrot.lane.b32.xlu0 %v715, 24
        %v747 = vpop.permute.xlu0 %746
        %v749 = vunpack.c.l.b16 %v273
        %v750 = vpack.c.b16 %v749, %v749
        %v752 = vshrl.u32 %v715, 16
        %v754 = vshll.u32 %v715, 16
        %v756 = vrot.slane %v754, 1
        %v757 = vor.u32 %v752, %v756
        %v759 = vshll.u32 %v750, 16
        %v761 = vrot.slane %v759, 1
        %v762 = vsel %vm405, %v757, %v761
        %763 = vrot.lane.b32.xlu0 %v429, 32
        %v764 = vpop.permute.xlu0 %763
        %765 = vrot.lane.b32.xlu0 %v441, 32
        %v766 = vpop.permute.xlu0 %765
        %767 = vrot.lane.b32.xlu0 %v453, 32
        %v768 = vpop.permute.xlu0 %767
        %769 = vrot.lane.b32.xlu0 %v465, 32
        %v770 = vpop.permute.xlu0 %769
        %771 = vrot.lane.b32.xlu0 %v477, 32
        %v772 = vpop.permute.xlu0 %771
        %773 = vrot.lane.b32.xlu0 %v489, 32
        %v774 = vpop.permute.xlu0 %773
        %775 = vrot.lane.b32.xlu0 %v501, 32
        %v776 = vpop.permute.xlu0 %775
        %777 = vrot.lane.b32.xlu0 %v513, 32
        %v778 = vpop.permute.xlu0 %777
        %779 = vrot.lane.b32.xlu0 %v525, 32
        %v780 = vpop.permute.xlu0 %779
        %781 = vrot.lane.b32.xlu0 %v537, 32
        %v782 = vpop.permute.xlu0 %781
        %783 = vrot.lane.b32.xlu0 %v549, 32
        %v784 = vpop.permute.xlu0 %783
        %785 = vrot.lane.b32.xlu0 %v561, 32
        %v786 = vpop.permute.xlu0 %785
        %787 = vrot.lane.b32.xlu0 %v573, 32
        %v788 = vpop.permute.xlu0 %787
        %789 = vrot.lane.b32.xlu0 %v585, 32
        %v790 = vpop.permute.xlu0 %789
        %791 = vrot.lane.b32.xlu0 %v597, 32
        %v792 = vpop.permute.xlu0 %791
        %793 = vrot.lane.b32.xlu0 %v762, 32
        %v794 = vpop.permute.xlu0 %793
        %v795 = vrot.slane %v715, 1
        %v796 = vrot.slane %v750, 1
        %v797 = vsel %vm630, %v795, %v796
        %798 = vrot.lane.b32.xlu0 %v636, 40
        %v799 = vpop.permute.xlu0 %798
        %800 = vrot.lane.b32.xlu0 %v639, 40
        %v801 = vpop.permute.xlu0 %800
        %802 = vrot.lane.b32.xlu0 %v642, 40
        %v803 = vpop.permute.xlu0 %802
        %804 = vrot.lane.b32.xlu0 %v645, 40
        %v805 = vpop.permute.xlu0 %804
        %806 = vrot.lane.b32.xlu0 %v648, 40
        %v807 = vpop.permute.xlu0 %806
        %808 = vrot.lane.b32.xlu0 %v651, 40
        %v809 = vpop.permute.xlu0 %808
        %810 = vrot.lane.b32.xlu0 %v654, 40
        %v811 = vpop.permute.xlu0 %810
        %812 = vrot.lane.b32.xlu0 %v657, 40
        %v813 = vpop.permute.xlu0 %812
        %814 = vrot.lane.b32.xlu0 %v660, 40
        %v815 = vpop.permute.xlu0 %814
        %816 = vrot.lane.b32.xlu0 %v663, 40
        %v817 = vpop.permute.xlu0 %816
        %818 = vrot.lane.b32.xlu0 %v666, 40
        %v819 = vpop.permute.xlu0 %818
        %820 = vrot.lane.b32.xlu0 %v669, 40
        %v821 = vpop.permute.xlu0 %820
        %822 = vrot.lane.b32.xlu0 %v672, 40
        %v823 = vpop.permute.xlu0 %822
        %824 = vrot.lane.b32.xlu0 %v675, 40
        %v825 = vpop.permute.xlu0 %824
        %826 = vrot.lane.b32.xlu0 %v678, 40
        %v827 = vpop.permute.xlu0 %826
        %828 = vrot.lane.b32.xlu0 %v797, 40
        %v829 = vpop.permute.xlu0 %828
        %v832 = vunpack.c.l.b16 %v274
        %v833 = vunpack.c.l.b16 %v275
        %v834 = vpack.c.b16 %v833, %v832
        %835 = vrot.lane.b32.xlu0 %v343, 48
        %v836 = vpop.permute.xlu0 %835
        %837 = vrot.lane.b32.xlu0 %v344, 48
        %v838 = vpop.permute.xlu0 %837
        %839 = vrot.lane.b32.xlu0 %v345, 48
        %v840 = vpop.permute.xlu0 %839
        %841 = vrot.lane.b32.xlu0 %v346, 48
        %v842 = vpop.permute.xlu0 %841
        %843 = vrot.lane.b32.xlu0 %v347, 48
        %v844 = vpop.permute.xlu0 %843
        %845 = vrot.lane.b32.xlu0 %v348, 48
        %v846 = vpop.permute.xlu0 %845
        %847 = vrot.lane.b32.xlu0 %v349, 48
        %v848 = vpop.permute.xlu0 %847
        %849 = vrot.lane.b32.xlu0 %v350, 48
        %v850 = vpop.permute.xlu0 %849
        %851 = vrot.lane.b32.xlu0 %v351, 48
        %v852 = vpop.permute.xlu0 %851
        %853 = vrot.lane.b32.xlu0 %v352, 48
        %v854 = vpop.permute.xlu0 %853
        %855 = vrot.lane.b32.xlu0 %v353, 48
        %v856 = vpop.permute.xlu0 %855
        %857 = vrot.lane.b32.xlu0 %v354, 48
        %v858 = vpop.permute.xlu0 %857
        %859 = vrot.lane.b32.xlu0 %v355, 48
        %v860 = vpop.permute.xlu0 %859
        %861 = vrot.lane.b32.xlu0 %v356, 48
        %v862 = vpop.permute.xlu0 %861
        %863 = vrot.lane.b32.xlu0 %v715, 48
        %v864 = vpop.permute.xlu0 %863
        %865 = vrot.lane.b32.xlu0 %v834, 48
        %v866 = vpop.permute.xlu0 %865
        %v868 = vunpack.c.l.b16 %v276
        %v869 = vpack.c.b16 %v868, %v868
        %v871 = vshrl.u32 %v834, 16
        %v873 = vshll.u32 %v834, 16
        %v875 = vrot.slane %v873, 1
        %v876 = vor.u32 %v871, %v875
        %v878 = vshll.u32 %v869, 16
        %v880 = vrot.slane %v878, 1
        %v881 = vsel %vm405, %v876, %v880
        %882 = vrot.lane.b32.xlu0 %v441, 56
        %v883 = vpop.permute.xlu0 %882
        %884 = vrot.lane.b32.xlu0 %v453, 56
        %v885 = vpop.permute.xlu0 %884
        %886 = vrot.lane.b32.xlu0 %v465, 56
        %v887 = vpop.permute.xlu0 %886
        %888 = vrot.lane.b32.xlu0 %v477, 56
        %v889 = vpop.permute.xlu0 %888
        %890 = vrot.lane.b32.xlu0 %v489, 56
        %v891 = vpop.permute.xlu0 %890
        %892 = vrot.lane.b32.xlu0 %v501, 56
        %v893 = vpop.permute.xlu0 %892
        %894 = vrot.lane.b32.xlu0 %v513, 56
        %v895 = vpop.permute.xlu0 %894
        %896 = vrot.lane.b32.xlu0 %v525, 56
        %v897 = vpop.permute.xlu0 %896
        %898 = vrot.lane.b32.xlu0 %v537, 56
        %v899 = vpop.permute.xlu0 %898
        %900 = vrot.lane.b32.xlu0 %v549, 56
        %v901 = vpop.permute.xlu0 %900
        %902 = vrot.lane.b32.xlu0 %v561, 56
        %v903 = vpop.permute.xlu0 %902
        %904 = vrot.lane.b32.xlu0 %v573, 56
        %v905 = vpop.permute.xlu0 %904
        %906 = vrot.lane.b32.xlu0 %v585, 56
        %v907 = vpop.permute.xlu0 %906
        %908 = vrot.lane.b32.xlu0 %v597, 56
        %v909 = vpop.permute.xlu0 %908
        %910 = vrot.lane.b32.xlu0 %v762, 56
        %v911 = vpop.permute.xlu0 %910
        %912 = vrot.lane.b32.xlu0 %v881, 56
        %v913 = vpop.permute.xlu0 %912
        %v914 = vrot.slane %v834, 1
        %v915 = vrot.slane %v869, 1
        %v916 = vsel %vm630, %v914, %v915
        %917 = vrot.lane.b32.xlu0 %v639, 64
        %v918 = vpop.permute.xlu0 %917
        %919 = vrot.lane.b32.xlu0 %v642, 64
        %v920 = vpop.permute.xlu0 %919
        %921 = vrot.lane.b32.xlu0 %v645, 64
        %v922 = vpop.permute.xlu0 %921
        %923 = vrot.lane.b32.xlu0 %v648, 64
        %v924 = vpop.permute.xlu0 %923
        %925 = vrot.lane.b32.xlu0 %v651, 64
        %v926 = vpop.permute.xlu0 %925
        %927 = vrot.lane.b32.xlu0 %v654, 64
        %v928 = vpop.permute.xlu0 %927
        %929 = vrot.lane.b32.xlu0 %v657, 64
        %v930 = vpop.permute.xlu0 %929
        %931 = vrot.lane.b32.xlu0 %v660, 64
        %v932 = vpop.permute.xlu0 %931
        %933 = vrot.lane.b32.xlu0 %v663, 64
        %v934 = vpop.permute.xlu0 %933
        %935 = vrot.lane.b32.xlu0 %v666, 64
        %v936 = vpop.permute.xlu0 %935
        %937 = vrot.lane.b32.xlu0 %v669, 64
        %v938 = vpop.permute.xlu0 %937
        %939 = vrot.lane.b32.xlu0 %v672, 64
        %v940 = vpop.permute.xlu0 %939
        %941 = vrot.lane.b32.xlu0 %v675, 64
        %v942 = vpop.permute.xlu0 %941
        %943 = vrot.lane.b32.xlu0 %v678, 64
        %v944 = vpop.permute.xlu0 %943
        %945 = vrot.lane.b32.xlu0 %v797, 64
        %v946 = vpop.permute.xlu0 %945
        %947 = vrot.lane.b32.xlu0 %v916, 64
        %v948 = vpop.permute.xlu0 %947
        %vm949 = vcmask 64512
        %v951 = vsel %vm949, %v341, %v599
        %v953 = vsel %vm949, %v342, %v601
        %v955 = vsel %vm949, %v343, %v603
        %v957 = vsel %vm949, %v344, %v605
        %v959 = vsel %vm949, %v345, %v607
        %v961 = vsel %vm949, %v346, %v609
        %v963 = vsel %vm949, %v347, %v611
        %v965 = vsel %vm949, %v348, %v613
        %v967 = vsel %vm949, %v349, %v615
        %v969 = vsel %vm949, %v350, %v617
        %v971 = vsel %vm949, %v351, %v619
        %v973 = vsel %vm949, %v352, %v621
        %v975 = vsel %vm949, %v353, %v623
        %v977 = vsel %vm949, %v354, %v625
        %v979 = vsel %vm949, %v355, %v627
        %v981 = vsel %vm949, %v356, %v629
        %vm982 = vcmask 130048
        %v984 = vsel %vm982, %v951, %v680
        %v986 = vsel %vm982, %v953, %v682
        %v988 = vsel %vm982, %v955, %v684
        %v990 = vsel %vm982, %v957, %v686
        %v992 = vsel %vm982, %v959, %v688
        %v994 = vsel %vm982, %v961, %v690
        %v996 = vsel %vm982, %v963, %v692
        %v998 = vsel %vm982, %v965, %v694
        %v1000 = vsel %vm982, %v967, %v696
        %v1002 = vsel %vm982, %v969, %v698
        %v1004 = vsel %vm982, %v971, %v700
        %v1006 = vsel %vm982, %v973, %v702
        %v1008 = vsel %vm982, %v975, %v704
        %v1010 = vsel %vm982, %v977, %v706
        %v1012 = vsel %vm982, %v979, %v708
        %v1014 = vsel %vm982, %v981, %v710
        %vm1015 = vcmask 195584
        %v1017 = vsel %vm1015, %v984, %v717
        %v1019 = vsel %vm1015, %v986, %v719
        %v1021 = vsel %vm1015, %v988, %v721
        %v1023 = vsel %vm1015, %v990, %v723
        %v1025 = vsel %vm1015, %v992, %v725
        %v1027 = vsel %vm1015, %v994, %v727
        %v1029 = vsel %vm1015, %v996, %v729
        %v1031 = vsel %vm1015, %v998, %v731
        %v1033 = vsel %vm1015, %v1000, %v733
        %v1035 = vsel %vm1015, %v1002, %v735
        %v1037 = vsel %vm1015, %v1004, %v737
        %v1039 = vsel %vm1015, %v1006, %v739
        %v1041 = vsel %vm1015, %v1008, %v741
        %v1043 = vsel %vm1015, %v1010, %v743
        %v1045 = vsel %vm1015, %v1012, %v745
        %v1047 = vsel %vm1015, %v1014, %v747
        %vm1048 = vcmask 261120
        %v1050 = vsel %vm1048, %v1017, %v764
        %v1052 = vsel %vm1048, %v1019, %v766
        %v1054 = vsel %vm1048, %v1021, %v768
        %v1056 = vsel %vm1048, %v1023, %v770
        %v1058 = vsel %vm1048, %v1025, %v772
        %v1060 = vsel %vm1048, %v1027, %v774
        %v1062 = vsel %vm1048, %v1029, %v776
        %v1064 = vsel %vm1048, %v1031, %v778
        %v1066 = vsel %vm1048, %v1033, %v780
        %v1068 = vsel %vm1048, %v1035, %v782
        %v1070 = vsel %vm1048, %v1037, %v784
        %v1072 = vsel %vm1048, %v1039, %v786
        %v1074 = vsel %vm1048, %v1041, %v788
        %v1076 = vsel %vm1048, %v1043, %v790
        %v1078 = vsel %vm1048, %v1045, %v792
        %v1080 = vsel %vm1048, %v1047, %v794
        %vm1081 = vcmask 326656
        %v1083 = vsel %vm1081, %v1050, %v799
        %v1085 = vsel %vm1081, %v1052, %v801
        %v1087 = vsel %vm1081, %v1054, %v803
        %v1089 = vsel %vm1081, %v1056, %v805
        %v1091 = vsel %vm1081, %v1058, %v807
        %v1093 = vsel %vm1081, %v1060, %v809
        %v1095 = vsel %vm1081, %v1062, %v811
        %v1097 = vsel %vm1081, %v1064, %v813
        %v1099 = vsel %vm1081, %v1066, %v815
        %v1101 = vsel %vm1081, %v1068, %v817
        %v1103 = vsel %vm1081, %v1070, %v819
        %v1105 = vsel %vm1081, %v1072, %v821
        %v1107 = vsel %vm1081, %v1074, %v823
        %v1109 = vsel %vm1081, %v1076, %v825
        %v1111 = vsel %vm1081, %v1078, %v827
        %v1113 = vsel %vm1081, %v1080, %v829
        %vm1114 = vcmask 392192
        %v1116 = vsel %vm1114, %v1083, %v836
        %v1118 = vsel %vm1114, %v1085, %v838
        %v1120 = vsel %vm1114, %v1087, %v840
        %v1122 = vsel %vm1114, %v1089, %v842
        %v1124 = vsel %vm1114, %v1091, %v844
        %v1126 = vsel %vm1114, %v1093, %v846
        %v1128 = vsel %vm1114, %v1095, %v848
        %v1130 = vsel %vm1114, %v1097, %v850
        %v1132 = vsel %vm1114, %v1099, %v852
        %v1134 = vsel %vm1114, %v1101, %v854
        %v1136 = vsel %vm1114, %v1103, %v856
        %v1138 = vsel %vm1114, %v1105, %v858
        %v1140 = vsel %vm1114, %v1107, %v860
        %v1142 = vsel %vm1114, %v1109, %v862
        %v1144 = vsel %vm1114, %v1111, %v864
        %v1146 = vsel %vm1114, %v1113, %v866
        %vm1147 = vcmask 457728
        %v1149 = vsel %vm1147, %v1116, %v883
        %v1151 = vsel %vm1147, %v1118, %v885
        %v1153 = vsel %vm1147, %v1120, %v887
        %v1155 = vsel %vm1147, %v1122, %v889
        %v1157 = vsel %vm1147, %v1124, %v891
        %v1159 = vsel %vm1147, %v1126, %v893
        %v1161 = vsel %vm1147, %v1128, %v895
        %v1163 = vsel %vm1147, %v1130, %v897
        %v1165 = vsel %vm1147, %v1132, %v899
        %v1167 = vsel %vm1147, %v1134, %v901
        %v1169 = vsel %vm1147, %v1136, %v903
        %v1171 = vsel %vm1147, %v1138, %v905
        %v1173 = vsel %vm1147, %v1140, %v907
        %v1175 = vsel %vm1147, %v1142, %v909
        %v1177 = vsel %vm1147, %v1144, %v911
        %v1179 = vsel %vm1147, %v1146, %v913
        %vm1180 = vcmask 523264
        %v1182 = vsel %vm1180, %v1149, %v918
        %v1184 = vsel %vm1180, %v1151, %v920
        %v1186 = vsel %vm1180, %v1153, %v922
        %v1188 = vsel %vm1180, %v1155, %v924
        %v1190 = vsel %vm1180, %v1157, %v926
        %v1192 = vsel %vm1180, %v1159, %v928
        %v1194 = vsel %vm1180, %v1161, %v930
        %v1196 = vsel %vm1180, %v1163, %v932
        %v1198 = vsel %vm1180, %v1165, %v934
        %v1200 = vsel %vm1180, %v1167, %v936
        %v1202 = vsel %vm1180, %v1169, %v938
        %v1204 = vsel %vm1180, %v1171, %v940
        %v1206 = vsel %vm1180, %v1173, %v942
        %v1208 = vsel %vm1180, %v1175, %v944
        %v1210 = vsel %vm1180, %v1177, %v946
        %v1212 = vsel %vm1180, %v1179, %v948
        %vm1213 = vcmask 588800
        %v1215 = vsel %vm1213, %v1182, 0
        %v1217 = vsel %vm1213, %v1184, 0
        %v1219 = vsel %vm1213, %v1186, 0
        %v1221 = vsel %vm1213, %v1188, 0
        %v1223 = vsel %vm1213, %v1190, 0
        %v1225 = vsel %vm1213, %v1192, 0
        %v1227 = vsel %vm1213, %v1194, 0
        %v1229 = vsel %vm1213, %v1196, 0
        %v1231 = vsel %vm1213, %v1198, 0
        %v1233 = vsel %vm1213, %v1200, 0
        %v1235 = vsel %vm1213, %v1202, 0
        %v1237 = vsel %vm1213, %v1204, 0
        %v1239 = vsel %vm1213, %v1206, 0
        %v1241 = vsel %vm1213, %v1208, 0
        %v1243 = vsel %vm1213, %v1210, 0
        %v1245 = vsel %vm1213, %v1212, 0
        %v1247 = vld [vmem:[%s1] sm:$0xf]
        %v1248 = vld [vmem:[%s1 + $0x4] sm:$0xf]
        %v1249 = vld [vmem:[%s1 + $0x8] sm:$0xf]
        %v1250 = vld [vmem:[%s1 + $0xc] sm:$0xf]
        %v1251 = vld [vmem:[%s1 + $0x10] sm:$0xf]
        %v1252 = vld [vmem:[%s1 + $0x14] sm:$0xf]
        %v1253 = vld [vmem:[%s1 + $0x18] sm:$0xf]
        %v1254 = vld [vmem:[%s1 + $0x1c] sm:$0xf]
        %v1255 = vld [vmem:[%s1 + $0x20] sm:$0xf]
        %v1256 = vld [vmem:[%s1 + $0x24] sm:$0xf]
        %v1257 = vld [vmem:[%s1 + $0x28] sm:$0xf]
        %v1258 = vld [vmem:[%s1 + $0x2c] sm:$0xf]
        %v1259 = vld [vmem:[%s1 + $0x30] sm:$0xf]
        %v1260 = vld [vmem:[%s1 + $0x34] sm:$0xf]
        %v1261 = vld [vmem:[%s1 + $0x38] sm:$0xf]
        %v1262 = vld [vmem:[%s1 + $0x3c] sm:$0xf]
        %v1263 = vld [vmem:[%s2] sm:$0x1]
        %v1265 = vlaneseq
        %v1266 = vshrl.u32 %v1265, 7
        %v1267 = vsub.s32 0, %v1266
        %v1268 = vrot.slane %v1263, %v1267
        %v1286 = vunpack.c.l.b16 %v1247
        %v1287 = vunpack.c.l.b16 %v1248
        %v1288 = vunpack.c.l.b16 %v1249
        %v1289 = vunpack.c.l.b16 %v1250
        %v1290 = vunpack.c.l.b16 %v1251
        %v1291 = vunpack.c.l.b16 %v1252
        %v1292 = vunpack.c.l.b16 %v1253
        %v1293 = vunpack.c.l.b16 %v1254
        %v1294 = vunpack.c.l.b16 %v1255
        %v1295 = vunpack.c.l.b16 %v1256
        %v1296 = vunpack.c.l.b16 %v1257
        %v1297 = vunpack.c.l.b16 %v1258
        %v1298 = vunpack.c.l.b16 %v1259
        %v1299 = vunpack.c.l.b16 %v1260
        %v1300 = vunpack.c.l.b16 %v1261
        %v1301 = vunpack.c.l.b16 %v1262
        %v1302 = vpack.c.b16 %v1287, %v1286
        %v1303 = vpack.c.b16 %v1289, %v1288
        %v1304 = vpack.c.b16 %v1291, %v1290
        %v1305 = vpack.c.b16 %v1293, %v1292
        %v1306 = vpack.c.b16 %v1295, %v1294
        %v1307 = vpack.c.b16 %v1297, %v1296
        %v1308 = vpack.c.b16 %v1299, %v1298
        %v1309 = vpack.c.b16 %v1301, %v1300
        %1318 = vmatprep.subr.bf16.mxu0 0
        %1319 = vmatpush1.bf16.msra.mxu0 %v1302
        %1320 = vmatprep.subr.bf16.mxu0 0
        %1321 = vmatpush1.bf16.msra.mxu0 %v1303
        %1322 = vmatprep.subr.bf16.mxu0 0
        %1323 = vmatpush1.bf16.msra.mxu0 %v1304
        %1324 = vmatprep.subr.bf16.mxu0 0
        %1325 = vmatpush1.bf16.msra.mxu0 %v1305
        %1326 = vmatprep.subr.bf16.mxu0 0
        %1327 = vmatpush1.bf16.msra.mxu0 %v1306
        %1328 = vmatprep.subr.bf16.mxu0 0
        %1329 = vmatpush1.bf16.msra.mxu0 %v1307
        %1330 = vmatprep.subr.bf16.mxu0 0
        %1331 = vmatpush1.bf16.msra.mxu0 %v1308
        %1332 = vmatprep.subr.bf16.mxu0 0
        %1333 = vmatpush1.bf16.msra.mxu0 %v1309
        %1334 = vmatprep.subr.bf16.mxu0 0
        %1335 = vmatpush1.bf16.msra.mxu0 0
        %1336 = vmatprep.subr.bf16.mxu0 0
        %1337 = vmatpush1.bf16.msra.mxu0 0
        %1338 = vmatprep.subr.bf16.mxu0 0
        %1339 = vmatpush1.bf16.msra.mxu0 0
        %1340 = vmatprep.subr.bf16.mxu0 0
        %1341 = vmatpush1.bf16.msra.mxu0 0
        %1342 = vmatprep.subr.bf16.mxu0 0
        %1343 = vmatpush1.bf16.msra.mxu0 0
        %1344 = vmatprep.subr.bf16.mxu0 0
        %1345 = vmatpush1.bf16.msra.mxu0 0
        %1346 = vmatprep.subr.bf16.mxu0 0
        %1347 = vmatpush1.bf16.msra.mxu0 0
        %1348 = vmatprep.subr.bf16.mxu0 0
        %1349 = vmatpush1.bf16.msra.mxu0 0
        %1350 = vmatprep.mubr.bf16.mxu0 0
        %1351 = vmatmul.mubr.bf16.gmra.mrb[0].mxu0 %v1215
        %v1352 = vpop.f32.mrb[0].mxu0
        %v1353 = vadd.f32 %v1268, %v1352
        %v1354 = vpop.f32.mrb[0].mxu0
        %v1355 = vpop.f32.mrb[0].mxu0
        %v1356 = vadd.f32 %v1268, %v1355
        %v1357 = vpop.f32.mrb[0].mxu0
        %1358 = vmatprep.mubr.bf16.mxu0 0
        %1359 = vmatmul.mubr.bf16.gmra.mrb[0].mxu0 %v1217
        %v1360 = vpop.f32.mrb[0].mxu0
        %v1361 = vadd.f32 %v1268, %v1360
        %v1362 = vpop.f32.mrb[0].mxu0
        %v1363 = vpop.f32.mrb[0].mxu0
        %v1364 = vadd.f32 %v1268, %v1363
        %v1365 = vpop.f32.mrb[0].mxu0
        %1366 = vmatprep.mubr.bf16.mxu0 0
        %1367 = vmatmul.mubr.bf16.gmra.mrb[0].mxu0 %v1219
        %v1368 = vpop.f32.mrb[0].mxu0
        %v1369 = vadd.f32 %v1268, %v1368
        %v1370 = vpop.f32.mrb[0].mxu0
        %v1371 = vpop.f32.mrb[0].mxu0
        %v1372 = vadd.f32 %v1268, %v1371
        %v1373 = vpop.f32.mrb[0].mxu0
        %1374 = vmatprep.mubr.bf16.mxu0 0
        %1375 = vmatmul.mubr.bf16.gmra.mrb[0].mxu0 %v1221
        %v1376 = vpop.f32.mrb[0].mxu0
        %v1377 = vadd.f32 %v1268, %v1376
        %v1378 = vpop.f32.mrb[0].mxu0
        %v1379 = vpop.f32.mrb[0].mxu0
        %v1380 = vadd.f32 %v1268, %v1379
        %v1381 = vpop.f32.mrb[0].mxu0
        %1382 = vmatprep.mubr.bf16.mxu0 0
        %1383 = vmatmul.mubr.bf16.gmra.mrb[0].mxu0 %v1223
        %v1384 = vpop.f32.mrb[0].mxu0
        %v1385 = vadd.f32 %v1268, %v1384
        %v1386 = vpop.f32.mrb[0].mxu0
        %v1387 = vpop.f32.mrb[0].mxu0
        %v1388 = vadd.f32 %v1268, %v1387
        %v1389 = vpop.f32.mrb[0].mxu0
        %1390 = vmatprep.mubr.bf16.mxu0 0
        %1391 = vmatmul.mubr.bf16.gmra.mrb[0].mxu0 %v1225
        %v1392 = vpop.f32.mrb[0].mxu0
        %v1393 = vadd.f32 %v1268, %v1392
        %v1394 = vpop.f32.mrb[0].mxu0
        %v1395 = vpop.f32.mrb[0].mxu0
        %v1396 = vadd.f32 %v1268, %v1395
        %v1397 = vpop.f32.mrb[0].mxu0
        %1398 = vmatprep.mubr.bf16.mxu0 0
        %1399 = vmatmul.mubr.bf16.gmra.mrb[0].mxu0 %v1227
        %v1400 = vpop.f32.mrb[0].mxu0
        %v1401 = vadd.f32 %v1268, %v1400
        %v1402 = vpop.f32.mrb[0].mxu0
        %v1403 = vpop.f32.mrb[0].mxu0
        %v1404 = vadd.f32 %v1268, %v1403
        %v1405 = vpop.f32.mrb[0].mxu0
        %1406 = vmatprep.mubr.bf16.mxu0 0
        %1407 = vmatmul.mubr.bf16.gmra.mrb[0].mxu0 %v1229
        %v1408 = vpop.f32.mrb[0].mxu0
        %v1409 = vadd.f32 %v1268, %v1408
        %v1410 = vpop.f32.mrb[0].mxu0
        %v1411 = vpop.f32.mrb[0].mxu0
        %v1412 = vadd.f32 %v1268, %v1411
        %v1413 = vpop.f32.mrb[0].mxu0
        %1414 = vmatprep.mubr.bf16.mxu0 0
        %1415 = vmatmul.mubr.bf16.gmra.mrb[0].mxu0 %v1231
        %v1416 = vpop.f32.mrb[0].mxu0
        %v1417 = vadd.f32 %v1268, %v1416
        %v1418 = vpop.f32.mrb[0].mxu0
        %v1419 = vpop.f32.mrb[0].mxu0
        %v1420 = vadd.f32 %v1268, %v1419
        %v1421 = vpop.f32.mrb[0].mxu0
        %1422 = vmatprep.mubr.bf16.mxu0 0
        %1423 = vmatmul.mubr.bf16.gmra.mrb[0].mxu0 %v1233
        %v1424 = vpop.f32.mrb[0].mxu0
        %v1425 = vadd.f32 %v1268, %v1424
        %v1426 = vpop.f32.mrb[0].mxu0
        %v1427 = vpop.f32.mrb[0].mxu0
        %v1428 = vadd.f32 %v1268, %v1427
        %v1429 = vpop.f32.mrb[0].mxu0
        %1430 = vmatprep.mubr.bf16.mxu0 0
        %1431 = vmatmul.mubr.bf16.gmra.mrb[0].mxu0 %v1235
        %v1432 = vpop.f32.mrb[0].mxu0
        %v1433 = vadd.f32 %v1268, %v1432
        %v1434 = vpop.f32.mrb[0].mxu0
        %v1435 = vpop.f32.mrb[0].mxu0
        %v1436 = vadd.f32 %v1268, %v1435
        %v1437 = vpop.f32.mrb[0].mxu0
        %1438 = vmatprep.mubr.bf16.mxu0 0
        %1439 = vmatmul.mubr.bf16.gmra.mrb[0].mxu0 %v1237
        %v1440 = vpop.f32.mrb[0].mxu0
        %v1441 = vadd.f32 %v1268, %v1440
        %v1442 = vpop.f32.mrb[0].mxu0
        %v1443 = vpop.f32.mrb[0].mxu0
        %v1444 = vadd.f32 %v1268, %v1443
        %v1445 = vpop.f32.mrb[0].mxu0
        %1446 = vmatprep.mubr.bf16.mxu0 0
        %1447 = vmatmul.mubr.bf16.gmra.mrb[0].mxu0 %v1239
        %v1448 = vpop.f32.mrb[0].mxu0
        %v1449 = vadd.f32 %v1268, %v1448
        %v1450 = vpop.f32.mrb[0].mxu0
        %v1451 = vpop.f32.mrb[0].mxu0
        %v1452 = vadd.f32 %v1268, %v1451
        %v1453 = vpop.f32.mrb[0].mxu0
        %1454 = vmatprep.mubr.bf16.mxu0 0
        %1455 = vmatmul.mubr.bf16.gmra.mrb[0].mxu0 %v1241
        %v1456 = vpop.f32.mrb[0].mxu0
        %v1457 = vadd.f32 %v1268, %v1456
        %v1458 = vpop.f32.mrb[0].mxu0
        %v1459 = vpop.f32.mrb[0].mxu0
        %v1460 = vadd.f32 %v1268, %v1459
        %v1461 = vpop.f32.mrb[0].mxu0
        %1462 = vmatprep.mubr.bf16.mxu0 0
        %1463 = vmatmul.mubr.bf16.gmra.mrb[0].mxu0 %v1243
        %v1464 = vpop.f32.mrb[0].mxu0
        %v1465 = vadd.f32 %v1268, %v1464
        %v1466 = vpop.f32.mrb[0].mxu0
        %v1467 = vpop.f32.mrb[0].mxu0
        %v1468 = vadd.f32 %v1268, %v1467
        %v1469 = vpop.f32.mrb[0].mxu0
        %1470 = vmatprep.mubr.bf16.mxu0 0
        %1471 = vmatmul.mubr.bf16.gmra.mrb[0].mxu0 %v1245
        %v1472 = vpop.f32.mrb[0].mxu0
        %v1473 = vadd.f32 %v1268, %v1472
        %v1474 = vpop.f32.mrb[0].mxu0
        %v1475 = vpop.f32.mrb[0].mxu0
        %v1476 = vadd.f32 %v1268, %v1475
        %v1477 = vpop.f32.mrb[0].mxu0
        %1478 = vdwg.mxu0
        %v1479 = vmax.f32 %v1353, 0.0
        %v1480 = vmax.f32 %v1356, 0.0
        %v1481 = vmax.f32 %v1361, 0.0
        %v1482 = vmax.f32 %v1364, 0.0
        %v1483 = vmax.f32 %v1369, 0.0
        %v1484 = vmax.f32 %v1372, 0.0
        %v1485 = vmax.f32 %v1377, 0.0
        %v1486 = vmax.f32 %v1380, 0.0
        %v1487 = vmax.f32 %v1385, 0.0
        %v1488 = vmax.f32 %v1388, 0.0
        %v1489 = vmax.f32 %v1393, 0.0
        %v1490 = vmax.f32 %v1396, 0.0
        %v1491 = vmax.f32 %v1401, 0.0
        %v1492 = vmax.f32 %v1404, 0.0
        %v1493 = vmax.f32 %v1409, 0.0
        %v1494 = vmax.f32 %v1412, 0.0
        %v1495 = vmax.f32 %v1417, 0.0
        %v1496 = vmax.f32 %v1420, 0.0
        %v1497 = vmax.f32 %v1425, 0.0
        %v1498 = vmax.f32 %v1428, 0.0
        %v1499 = vmax.f32 %v1433, 0.0
        %v1500 = vmax.f32 %v1436, 0.0
        %v1501 = vmax.f32 %v1441, 0.0
        %v1502 = vmax.f32 %v1444, 0.0
        %v1503 = vmax.f32 %v1449, 0.0
        %v1504 = vmax.f32 %v1452, 0.0
        %v1505 = vmax.f32 %v1457, 0.0
        %v1506 = vmax.f32 %v1460, 0.0
        %v1507 = vmax.f32 %v1465, 0.0
        %v1508 = vmax.f32 %v1468, 0.0
        %v1509 = vmax.f32 %v1473, 0.0
        %v1510 = vmax.f32 %v1476, 0.0
        %v1511 = vadd.f32 %v1479, %v1480
        %v1512 = vadd.f32 %v1511, %v1481
        %v1513 = vadd.f32 %v1512, %v1482
        %v1514 = vadd.f32 %v1513, %v1483
        %v1515 = vadd.f32 %v1514, %v1484
        %v1516 = vadd.f32 %v1515, %v1485
        %v1517 = vadd.f32 %v1516, %v1486
        %v1518 = vadd.f32 %v1517, %v1487
        %v1519 = vadd.f32 %v1518, %v1488
        %v1520 = vadd.f32 %v1519, %v1489
        %v1521 = vadd.f32 %v1520, %v1490
        %v1522 = vadd.f32 %v1521, %v1491
        %v1523 = vadd.f32 %v1522, %v1492
        %v1524 = vadd.f32 %v1523, %v1493
        %v1525 = vadd.f32 %v1524, %v1494
        %v1526 = vadd.f32 %v1525, %v1495
        %v1527 = vadd.f32 %v1526, %v1496
        %v1528 = vadd.f32 %v1527, %v1497
        %v1529 = vadd.f32 %v1528, %v1498
        %v1530 = vadd.f32 %v1529, %v1499
        %v1531 = vadd.f32 %v1530, %v1500
        %v1532 = vadd.f32 %v1531, %v1501
        %v1533 = vadd.f32 %v1532, %v1502
        %v1534 = vadd.f32 %v1533, %v1503
        %v1535 = vadd.f32 %v1534, %v1504
        %v1536 = vadd.f32 %v1535, %v1505
        %v1537 = vadd.f32 %v1536, %v1506
        %v1538 = vadd.f32 %v1537, %v1507
        %v1539 = vadd.f32 %v1538, %v1508
        %v1540 = vadd.f32 %v1539, %v1509
        %v1541 = vadd.f32 %v1540, %v1510
        %v1542 = vrot.slane %v1541, 4
        %v1543 = vadd.f32 %v1541, %v1542
        %v1544 = vrot.slane %v1543, 2
        %v1545 = vadd.f32 %v1543, %v1544
        %v1546 = vrot.slane %v1545, 1
        %v1547 = vadd.f32 %v1545, %v1546
        %v1548 = vmul.f32 %v1547, 0.00390625
        %v1549 = vpack.c.bf16 %v1548, %v1548
        %v1550 = vld [vmem:[%s3] sm:$0xf]
        %v1551 = vld [vmem:[%s3 + $0x4] sm:$0xf]
        %v1552 = vld [vmem:[%s3 + $0x8] sm:$0xf]
        %v1553 = vld [vmem:[%s3 + $0xc] sm:$0xf]
        %v1554 = vld [vmem:[%s3 + $0x10] sm:$0xf]
        %v1555 = vld [vmem:[%s3 + $0x14] sm:$0xf]
        %v1556 = vld [vmem:[%s3 + $0x18] sm:$0xf]
        %v1557 = vld [vmem:[%s3 + $0x1c] sm:$0xf]
        %v1558 = vld [vmem:[%s3 + $0x20] sm:$0xf]
        %v1559 = vld [vmem:[%s3 + $0x24] sm:$0xf]
        %v1560 = vld [vmem:[%s3 + $0x28] sm:$0xf]
        %v1561 = vld [vmem:[%s3 + $0x2c] sm:$0xf]
        %v1562 = vld [vmem:[%s3 + $0x30] sm:$0xf]
        %v1563 = vld [vmem:[%s3 + $0x34] sm:$0xf]
        %v1564 = vld [vmem:[%s3 + $0x38] sm:$0xf]
        %v1565 = vld [vmem:[%s3 + $0x3c] sm:$0xf]
        %v1566 = vld [vmem:[%s4] sm:$0x1]
        %v1583 = vunpack.c.l.b16 %v1550
        %v1584 = vunpack.c.l.b16 %v1551
        %v1585 = vunpack.c.l.b16 %v1552
        %v1586 = vunpack.c.l.b16 %v1553
        %v1587 = vunpack.c.l.b16 %v1554
        %v1588 = vunpack.c.l.b16 %v1555
        %v1589 = vunpack.c.l.b16 %v1556
        %v1590 = vunpack.c.l.b16 %v1557
        %v1591 = vunpack.c.l.b16 %v1558
        %v1592 = vunpack.c.l.b16 %v1559
        %v1593 = vunpack.c.l.b16 %v1560
        %v1594 = vunpack.c.l.b16 %v1561
        %v1595 = vunpack.c.l.b16 %v1562
        %v1596 = vunpack.c.l.b16 %v1563
        %v1597 = vunpack.c.l.b16 %v1564
        %v1598 = vunpack.c.l.b16 %v1565
        %v1599 = vpack.c.b16 %v1584, %v1583
        %v1600 = vpack.c.b16 %v1586, %v1585
        %v1601 = vpack.c.b16 %v1588, %v1587
        %v1602 = vpack.c.b16 %v1590, %v1589
        %v1603 = vpack.c.b16 %v1592, %v1591
        %v1604 = vpack.c.b16 %v1594, %v1593
        %v1605 = vpack.c.b16 %v1596, %v1595
        %v1606 = vpack.c.b16 %v1598, %v1597
        %1615 = vmatprep.subr.bf16.mxu0 0
        %1616 = vmatpush1.bf16.msra.mxu0 %v1599
        %1617 = vmatprep.subr.bf16.mxu0 0
        %1618 = vmatpush1.bf16.msra.mxu0 %v1600
        %1619 = vmatprep.subr.bf16.mxu0 0
        %1620 = vmatpush1.bf16.msra.mxu0 %v1601
        %1621 = vmatprep.subr.bf16.mxu0 0
        %1622 = vmatpush1.bf16.msra.mxu0 %v1602
        %1623 = vmatprep.subr.bf16.mxu0 0
        %1624 = vmatpush1.bf16.msra.mxu0 %v1603
        %1625 = vmatprep.subr.bf16.mxu0 0
        %1626 = vmatpush1.bf16.msra.mxu0 %v1604
        %1627 = vmatprep.subr.bf16.mxu0 0
        %1628 = vmatpush1.bf16.msra.mxu0 %v1605
        %1629 = vmatprep.subr.bf16.mxu0 0
        %1630 = vmatpush1.bf16.msra.mxu0 %v1606
        %1631 = vmatprep.subr.bf16.mxu0 0
        %1632 = vmatpush1.bf16.msra.mxu0 0
        %1633 = vmatprep.subr.bf16.mxu0 0
        %1634 = vmatpush1.bf16.msra.mxu0 0
        %1635 = vmatprep.subr.bf16.mxu0 0
        %1636 = vmatpush1.bf16.msra.mxu0 0
        %1637 = vmatprep.subr.bf16.mxu0 0
        %1638 = vmatpush1.bf16.msra.mxu0 0
        %1639 = vmatprep.subr.bf16.mxu0 0
        %1640 = vmatpush1.bf16.msra.mxu0 0
        %1641 = vmatprep.subr.bf16.mxu0 0
        %1642 = vmatpush1.bf16.msra.mxu0 0
        %1643 = vmatprep.subr.bf16.mxu0 0
        %1644 = vmatpush1.bf16.msra.mxu0 0
        %1645 = vmatprep.subr.bf16.mxu0 0
        %1646 = vmatpush1.bf16.msra.mxu0 0
        %1647 = vmatprep.mubr.bf16.mxu0 0
        %1648 = vmatmul.mubr.bf16.gmra.mrb[0].mxu0 %v1549
        %v1649 = vpop.f32.mrb[0].mxu0
        %v1650 = vadd.f32 %v1566, %v1649
        %v1651 = vpop.f32.mrb[0].mxu0
        %v1652 = vpop.f32.mrb[0].mxu0
        %v1653 = vpop.f32.mrb[0].mxu0
        %1654 = vdwg.mxu0
        %v1655 = vlaneseq
        %v1656 = vand.u32 %v1655, 127
        %vm1657 = vcmp.lt.s32.totalorder %v1656, 10
        %v1658 = vsel %vm1657, %v1650, -inf
        %vm1659 = vcmask 1040384
        %v1660 = vsel %vm1659, %v1658, -inf
        %1661 = vmax.xlane.f32.xlu0 %v1660
        %v1662 = vpop.xlane.xlu0 %1661
        %v1663 = vsub.f32 %v1658, %v1662
        %v1664 = vmul.f32 %v1663, 1.442695
        %v1665 = vpow.pop %v1664
        %v1666 = vsel %vm1659, %v1665, 0.0
        %1667 = vadd.xlane.f32.xlu0 %v1666
        %v1668 = vpop.xlane.xlu0 %1667
        %v1669 = vrcp.pop %v1668
        %v1670 = vmul.f32 %v1665, %v1669
        %1671 = vst [vmem:[%s216] sm:$0x1] %v1670
        %s1672 = sand.u32 %s137, 1
        %s1673 = scalar_lea.sflag [#allocation3], %s1672
        %s1674 = sand.u32 %s137, 1
        %s1675 = scalar_lea.vmem [#allocation2], %s1674
        // Predicated region
        $region41: #{tpu_custom_call.1} parent=39 // pred_check
          %p1676 = pneg %p147
        $region42: #{tpu_custom_call.1} parent=39 // pred_check_branch
          %1678 = sbr.rel (%p1676) target = $region44
        $region43: #{tpu_custom_call.1} parent=39 // pred_region
          %s1680 = ssub.s32 16, 16
          %1681 = vsyncadd %s1673, %s1680
          %s1682 = smul.addr %s19, 16
          %s1683 = scalar_lea.hbm %s5, %s1682
          %s1685 = sshll.u32 %s1675, 4
          %s1686 = int_to_ptr.vmem [resolvable:$true] %s1685
          %1688 = dma.vmem_to_hbm [thread:$0]  %s1686, 16, %s1683, %s1673
        $region44: #{tpu_custom_call.1} parent=39 // pred_fallthru
          _
      $region40: #{tpu_custom_call.1} parent=5 // pred_fallthru
        _
      %p1689 = scmp.le.s32.totalorder 2, %s14
      // Predicated region
      $region45: #{tpu_custom_call.1} parent=5 // pred_check
        %p1690 = pneg %p1689
      $region46: #{tpu_custom_call.1} parent=5 // pred_check_branch
        %1692 = sbr.rel (%p1690) target = $region48
      $region47: #{tpu_custom_call.1} parent=5 // pred_region
        %s1693 = ssub.s32 %s14, 2
        // Predicated region
        $region49: #{tpu_custom_call.1} parent=47 // pred_check
          %p1694 = pneg %p153
        $region50: #{tpu_custom_call.1} parent=47 // pred_check_branch
          %1696 = sbr.rel (%p1694) target = $region52
        $region51: #{tpu_custom_call.1} parent=47 // pred_region
          %s1697 = sand.u32 %s138, 1
          %s1698 = scalar_lea.sflag [#allocation3], %s1697
          %s1699 = sand.u32 %s138, 1
          %s1700 = scalar_lea.vmem [#allocation2], %s1699
          %1701 = dma.done %s1698, 16
        $region52: #{tpu_custom_call.1} parent=47 // pred_fallthru
          _
      $region48: #{tpu_custom_call.1} parent=5 // pred_fallthru
        _
    $region6: #{tpu_custom_call.1} parent=1 // loop_footer
      %s18 = sadd.s32 1, %s14
    $region7: #{tpu_custom_call.1} parent=1 // loop_footer_branch
      %13 = sbr.rel target = $region3
    $region8: #{tpu_custom_call.1} parent=1 // loop_exit
      _
    %1702 = vsyncpa [#allocation3], 1
    %s1703 = scalar_lea.sflag [#allocation3], 1
    %1704 = vsyncpa %s1703, 1

</llo_original>
